<compile_context>
chip_gen: v7x
topology: tpu7x:2x2x1
jax: 0.10.0
libtpu: 0.0.40
codegen_flags: <defaults>
</compile_context>

<pallas_src>
import jax
import jax.numpy as jnp
from jax.experimental import pallas as pl
from jax.experimental.pallas import tpu as pltpu

# Problem sizes (consistent with the module: hidden_size=32, num_hidden_size=2)
OBS_DIM = 32
HIDDEN = 32          # hidden_size (== number of invariant fields)
GROUP = 8            # group order of the regular representation
ENC_OUT = GROUP * HIDDEN   # 256

B_TILE = 128         # batch rows per grid step (matches MXU row width)
OUT_PAD = 128        # lane-dense padding for 32/1-wide weight columns and the output

BIAS_W = ENC_OUT + 3 * OUT_PAD   # packed bias slab width (640)
WH_W = 3 * OUT_PAD               # packed head-weight slab width (384)


def _value_kernel(x_ref, we_ref, g_ref, wh_ref, b_ref, o_ref):
    x = x_ref[...]                                                   # (B_TILE, OBS_DIM)

    # packed operands (all slice starts are 128-lane aligned)
    be = b_ref[:, 0:ENC_OUT]                                         # (1, 256)
    bo = b_ref[:, ENC_OUT:ENC_OUT + OUT_PAD]                         # (1, 128)  col 0 = real bias
    b1 = b_ref[:, ENC_OUT + OUT_PAD:ENC_OUT + OUT_PAD + HIDDEN]      # (1, 32)
    b2 = b_ref[:, ENC_OUT + 2 * OUT_PAD:ENC_OUT + 2 * OUT_PAD + HIDDEN]  # (1, 32)
    w1 = wh_ref[:, 0:HIDDEN]                                         # (32, 32)
    w2 = wh_ref[:, OUT_PAD:OUT_PAD + HIDDEN]                         # (32, 32)
    wo = wh_ref[:, 2 * OUT_PAD:3 * OUT_PAD]                          # (32, 128) col 0 = real wo

    # ---- encoder: Linear(OBS_DIM -> GROUP*HIDDEN) + ReLU (MXU) ----
    enc = jnp.dot(x, we_ref[...], preferred_element_type=jnp.float32) + be
    enc = jnp.maximum(enc, 0.0)                                      # (B_TILE, 256)

    # ---- compute_invariant_features: L2 norm over the group axis per field ----
    # columns of `enc` are ordered [g*HIDDEN + f]; the group-sum of squares is done as one
    # MXU matmul against a constant 0/1 gather matrix G (256, 32): G[g*HIDDEN + f, f] = 1.
    sq = enc * enc
    inv = jnp.sqrt(jnp.dot(sq, g_ref[...], preferred_element_type=jnp.float32))   # (B_TILE, 32)

    # ---- head: 2 x (Linear(HIDDEN, HIDDEN) + ReLU) ----
    h = jnp.maximum(jnp.dot(inv, w1, preferred_element_type=jnp.float32) + b1, 0.0)
    h = jnp.maximum(jnp.dot(h, w2, preferred_element_type=jnp.float32) + b2, 0.0)

    # ---- out_fc: Linear(HIDDEN, 1), computed lane-dense as (B_TILE, 128); col 0 is the value ----
    o_ref[...] = jnp.dot(h, wo, preferred_element_type=jnp.float32) + bo


def prepare_params(p):
    """One-time (load-time) packing of raw parameters into kernel operand layout."""
    # group-gather matrix: sums squared features over the group axis (column order g*HIDDEN+f)
    rows = jnp.arange(ENC_OUT) % HIDDEN
    gmat = (rows[:, None] == jnp.arange(HIDDEN)[None, :]).astype(jnp.float32)   # (256, 32)

    wh = jnp.zeros((HIDDEN, WH_W), jnp.float32)
    wh = wh.at[:, 0:HIDDEN].set(p["w1"])
    wh = wh.at[:, OUT_PAD:OUT_PAD + HIDDEN].set(p["w2"])
    wh = wh.at[:, 2 * OUT_PAD:2 * OUT_PAD + 1].set(p["wo"])

    b = jnp.zeros((1, BIAS_W), jnp.float32)
    b = b.at[:, 0:ENC_OUT].set(p["be"])
    b = b.at[:, ENC_OUT:ENC_OUT + 1].set(p["bo"])
    b = b.at[:, ENC_OUT + OUT_PAD:ENC_OUT + OUT_PAD + HIDDEN].set(p["b1"])
    b = b.at[:, ENC_OUT + 2 * OUT_PAD:ENC_OUT + 2 * OUT_PAD + HIDDEN].set(p["b2"])

    return {"we": p["we"], "G": gmat, "wh": wh, "b": b}


def equivariant_value_function(x, packed):
    """x: (B, OBS_DIM) f32. packed: output of prepare_params. Returns (B, 1) f32."""
    B = x.shape[0]
    b_pad = pl.cdiv(B, B_TILE) * B_TILE
    if b_pad != B:
        x = jnp.pad(x, ((0, b_pad - B), (0, 0)))
    grid = (b_pad // B_TILE,)

    out = pl.pallas_call(
        _value_kernel,
        out_shape=jax.ShapeDtypeStruct((b_pad, OUT_PAD), jnp.float32),
        grid=grid,
        in_specs=[
            pl.BlockSpec((B_TILE, OBS_DIM), lambda i: (i, 0)),      # x: tiled over batch
            pl.BlockSpec((OBS_DIM, ENC_OUT), lambda i: (0, 0)),     # we: VMEM-resident
            pl.BlockSpec((ENC_OUT, HIDDEN), lambda i: (0, 0)),      # G
            pl.BlockSpec((HIDDEN, WH_W), lambda i: (0, 0)),         # packed head weights
            pl.BlockSpec((1, BIAS_W), lambda i: (0, 0)),            # packed biases
        ],
        out_specs=pl.BlockSpec((B_TILE, OUT_PAD), lambda i: (i, 0)),
        compiler_params=pltpu.CompilerParams(dimension_semantics=("parallel",)),
    )(x, packed["we"], packed["G"], packed["wh"], packed["b"])

    return out[:B, :1]


def _init_params(key):
    """Deterministic synthetic parameters.  Linear weights stored as (in, out) so the
    kernel does y = x @ W + b  (equivalent to PyTorch's y = x @ W.T + b with W=(out,in))."""
    ks = jax.random.split(key, 8)
    scale = 0.1
    return {
        "we": scale * jax.random.normal(ks[0], (OBS_DIM, ENC_OUT), jnp.float32),
        "be": scale * jax.random.normal(ks[1], (1, ENC_OUT), jnp.float32),
        "w1": scale * jax.random.normal(ks[2], (HIDDEN, HIDDEN), jnp.float32),
        "b1": scale * jax.random.normal(ks[3], (1, HIDDEN), jnp.float32),
        "w2": scale * jax.random.normal(ks[4], (HIDDEN, HIDDEN), jnp.float32),
        "b2": scale * jax.random.normal(ks[5], (1, HIDDEN), jnp.float32),
        "wo": scale * jax.random.normal(ks[6], (HIDDEN, 1), jnp.float32),
        "bo": scale * jax.random.normal(ks[7], (1, 1), jnp.float32),
    }


def _reference(x, p):
    """Pure-JAX reference of the same forward pass (for a sanity check)."""
    enc = jnp.maximum(x @ p["we"] + p["be"], 0.0)
    enc3 = enc.reshape(x.shape[0], GROUP, HIDDEN)          # group slowest, field fastest
    inv = jnp.sqrt(jnp.sum(enc3 * enc3, axis=1))
    h = jnp.maximum(inv @ p["w1"] + p["b1"], 0.0)
    h = jnp.maximum(h @ p["w2"] + p["b2"], 0.0)
    return h @ p["wo"] + p["bo"]


if __name__ == "__main__":
    key = jax.random.PRNGKey(0)
    k_x, k_p = jax.random.split(key)

    BATCH = 200  # non-multiple of the 128-row tile: exercises padding + a 2-step parallel grid
    x = jax.random.normal(k_x, (BATCH, OBS_DIM), jnp.float32)
    params = _init_params(k_p)
    packed = prepare_params(params)

    out = equivariant_value_function(x, packed)
    out = jax.block_until_ready(out)

    ref = _reference(x, params)
    assert out.shape == (BATCH, 1)
    assert jnp.allclose(out, ref, atol=1e-4, rtol=1e-4), float(jnp.max(jnp.abs(out - ref)))
    print("KERNEL_OK")
</pallas_src>

<mosaic_0001>
module attributes {stable_mosaic.version = 11 : i64} {
  func.func @_value_kernel(%arg0: i32, %arg1: memref<128x32xf32, #tpu.memory_space<vmem>>, %arg2: memref<32x256xf32, #tpu.memory_space<vmem>>, %arg3: memref<256x32xf32, #tpu.memory_space<vmem>>, %arg4: memref<32x384xf32, #tpu.memory_space<vmem>>, %arg5: memref<1x640xf32, #tpu.memory_space<vmem>>, %arg6: memref<128x128xf32, #tpu.memory_space<vmem>>) attributes {dimension_semantics = [#tpu.dimension_semantics<parallel>], iteration_bounds = array<i64: 2>, scalar_prefetch = 0 : i64, scratch_operands = 0 : i64, tpu.core_type = #tpu.core_type<tc>, window_params = [{transform_indices = @transform_0, window_bounds = array<i64: 128, 32>}, {pipeline_mode = #tpu.pipeline_mode<synchronous>, transform_indices = @transform_1, window_bounds = array<i64: 32, 256>}, {pipeline_mode = #tpu.pipeline_mode<synchronous>, transform_indices = @transform_2, window_bounds = array<i64: 256, 32>}, {pipeline_mode = #tpu.pipeline_mode<synchronous>, transform_indices = @transform_3, window_bounds = array<i64: 32, 384>}, {pipeline_mode = #tpu.pipeline_mode<synchronous>, transform_indices = @transform_4, window_bounds = array<i64: 1, 640>}, {transform_indices = @transform_5, window_bounds = array<i64: 128, 128>}]} {
    %c0 = arith.constant 0 : index
    %c0_0 = arith.constant 0 : index
    %0 = vector.load %arg1[%c0, %c0_0] : memref<128x32xf32, #tpu.memory_space<vmem>>, vector<128x32xf32>
    %c0_1 = arith.constant 0 : index
    %c0_2 = arith.constant 0 : index
    %1 = vector.load %arg5[%c0_1, %c0_2] : memref<1x640xf32, #tpu.memory_space<vmem>>, vector<1x256xf32>
    %c0_3 = arith.constant 0 : index
    %c256 = arith.constant 256 : index
    %2 = vector.load %arg5[%c0_3, %c256] : memref<1x640xf32, #tpu.memory_space<vmem>>, vector<1x128xf32>
    %c0_4 = arith.constant 0 : index
    %c384 = arith.constant 384 : index
    %3 = vector.load %arg5[%c0_4, %c384] : memref<1x640xf32, #tpu.memory_space<vmem>>, vector<1x32xf32>
    %c0_5 = arith.constant 0 : index
    %c512 = arith.constant 512 : index
    %4 = vector.load %arg5[%c0_5, %c512] : memref<1x640xf32, #tpu.memory_space<vmem>>, vector<1x32xf32>
    %c0_6 = arith.constant 0 : index
    %c0_7 = arith.constant 0 : index
    %5 = vector.load %arg4[%c0_6, %c0_7] : memref<32x384xf32, #tpu.memory_space<vmem>>, vector<32x32xf32>
    %c0_8 = arith.constant 0 : index
    %c128 = arith.constant 128 : index
    %6 = vector.load %arg4[%c0_8, %c128] : memref<32x384xf32, #tpu.memory_space<vmem>>, vector<32x32xf32>
    %c0_9 = arith.constant 0 : index
    %c256_10 = arith.constant 256 : index
    %7 = vector.load %arg4[%c0_9, %c256_10] : memref<32x384xf32, #tpu.memory_space<vmem>>, vector<32x128xf32>
    %c0_11 = arith.constant 0 : index
    %c0_12 = arith.constant 0 : index
    %8 = vector.load %arg2[%c0_11, %c0_12] : memref<32x256xf32, #tpu.memory_space<vmem>>, vector<32x256xf32>
    %cst = arith.constant dense<0.000000e+00> : vector<128x256xf32>
    %9 = tpu.matmul %0, %8, %cst {dimension_numbers = #tpu.dot_dimension_numbers<[1], [0], [0], [1], [0, 0, 1, 1], [], []>} : vector<128x32xf32>, vector<32x256xf32>, vector<128x256xf32> -> vector<128x256xf32>
    %10 = vector.broadcast %1 : vector<1x256xf32> to vector<128x256xf32>
    %11 = arith.addf %9, %10 : vector<128x256xf32>
    %cst_13 = arith.constant 0.000000e+00 : f32
    %12 = vector.broadcast %cst_13 : f32 to vector<128x256xf32>
    %13 = arith.maximumf %11, %12 : vector<128x256xf32>
    %14 = arith.mulf %13, %13 : vector<128x256xf32>
    %c0_14 = arith.constant 0 : index
    %c0_15 = arith.constant 0 : index
    %15 = vector.load %arg3[%c0_14, %c0_15] : memref<256x32xf32, #tpu.memory_space<vmem>>, vector<256x32xf32>
    %cst_16 = arith.constant dense<0.000000e+00> : vector<128x32xf32>
    %16 = tpu.matmul %14, %15, %cst_16 {dimension_numbers = #tpu.dot_dimension_numbers<[1], [0], [0], [1], [0, 0, 1, 1], [], []>} : vector<128x256xf32>, vector<256x32xf32>, vector<128x32xf32> -> vector<128x32xf32>
    %17 = math.sqrt %16 : vector<128x32xf32>
    %cst_17 = arith.constant dense<0.000000e+00> : vector<128x32xf32>
    %18 = tpu.matmul %17, %5, %cst_17 {dimension_numbers = #tpu.dot_dimension_numbers<[1], [0], [0], [1], [0, 0, 1, 1], [], []>} : vector<128x32xf32>, vector<32x32xf32>, vector<128x32xf32> -> vector<128x32xf32>
    %19 = vector.broadcast %3 : vector<1x32xf32> to vector<128x32xf32>
    %20 = arith.addf %18, %19 : vector<128x32xf32>
    %cst_18 = arith.constant 0.000000e+00 : f32
    %21 = vector.broadcast %cst_18 : f32 to vector<128x32xf32>
    %22 = arith.maximumf %20, %21 : vector<128x32xf32>
    %cst_19 = arith.constant dense<0.000000e+00> : vector<128x32xf32>
    %23 = tpu.matmul %22, %6, %cst_19 {dimension_numbers = #tpu.dot_dimension_numbers<[1], [0], [0], [1], [0, 0, 1, 1], [], []>} : vector<128x32xf32>, vector<32x32xf32>, vector<128x32xf32> -> vector<128x32xf32>
    %24 = vector.broadcast %4 : vector<1x32xf32> to vector<128x32xf32>
    %25 = arith.addf %23, %24 : vector<128x32xf32>
    %cst_20 = arith.constant 0.000000e+00 : f32
    %26 = vector.broadcast %cst_20 : f32 to vector<128x32xf32>
    %27 = arith.maximumf %25, %26 : vector<128x32xf32>
    %cst_21 = arith.constant dense<0.000000e+00> : vector<128x128xf32>
    %28 = tpu.matmul %27, %7, %cst_21 {dimension_numbers = #tpu.dot_dimension_numbers<[1], [0], [0], [1], [0, 0, 1, 1], [], []>} : vector<128x32xf32>, vector<32x128xf32>, vector<128x128xf32> -> vector<128x128xf32>
    %29 = vector.broadcast %2 : vector<1x128xf32> to vector<128x128xf32>
    %30 = arith.addf %28, %29 : vector<128x128xf32>
    %c0_22 = arith.constant 0 : index
    %c0_23 = arith.constant 0 : index
    %31 = vector.load %arg6[%c0_22, %c0_23] : memref<128x128xf32, #tpu.memory_space<vmem>>, vector<128x128xf32>
    tpu.vector_store %arg6[%c0_22, %c0_23], %30 {strides = array<i32>} : memref<128x128xf32, #tpu.memory_space<vmem>>, vector<128x128xf32>,
    return
  }
  func.func @transform_0(%arg0: i32) -> (i32, i32) {
    %c0_i32 = arith.constant 0 : i32
    %c0_i32_0 = arith.constant 0 : i32
    return %arg0, %c0_i32 : i32, i32
  }
  func.func @transform_1(%arg0: i32) -> (i32, i32) {
    %c0_i32 = arith.constant 0 : i32
    %c0_i32_0 = arith.constant 0 : i32
    %c0_i32_1 = arith.constant 0 : i32
    return %c0_i32, %c0_i32_0 : i32, i32
  }
  func.func @transform_2(%arg0: i32) -> (i32, i32) {
    %c0_i32 = arith.constant 0 : i32
    %c0_i32_0 = arith.constant 0 : i32
    %c0_i32_1 = arith.constant 0 : i32
    return %c0_i32, %c0_i32_0 : i32, i32
  }
  func.func @transform_3(%arg0: i32) -> (i32, i32) {
    %c0_i32 = arith.constant 0 : i32
    %c0_i32_0 = arith.constant 0 : i32
    %c0_i32_1 = arith.constant 0 : i32
    return %c0_i32, %c0_i32_0 : i32, i32
  }
  func.func @transform_4(%arg0: i32) -> (i32, i32) {
    %c0_i32 = arith.constant 0 : i32
    %c0_i32_0 = arith.constant 0 : i32
    %c0_i32_1 = arith.constant 0 : i32
    return %c0_i32, %c0_i32_0 : i32, i32
  }
  func.func @transform_5(%arg0: i32) -> (i32, i32) {
    %c0_i32 = arith.constant 0 : i32
    %c0_i32_0 = arith.constant 0 : i32
    return %arg0, %c0_i32 : i32, i32
  }
}

</mosaic_0001>

<llo_original>
// kernel: tpu_custom_call.1
$region0: #{tpu_custom_call.1}
  #allocation0 [shape = 'u32[]', space=smem, size = 0x4, offset = 0x4, fixed_abs, tag = 'smem constant byte address 0x4 - core index']
  #allocation1 [shape = 'u32[144,128]{1,0:T(1,128)}', space=vmem, size = 0x12000, scoped, tag = 'internal scratch']
  %s0 = inlined_call_operand.vmem [shape: f32[256,32], index: 0, kind: input, shape index: {}]
  %s1 = inlined_call_operand.vmem [shape: f32[32,256], index: 1, kind: input, shape index: {}]
  %s2 = inlined_call_operand.vmem [shape: f32[256,32], index: 2, kind: input, shape index: {}]
  %s3 = inlined_call_operand.vmem [shape: f32[32,384], index: 3, kind: input, shape index: {}]
  %s4 = inlined_call_operand.vmem [shape: f32[1,640], index: 4, kind: input, shape index: {}]
  %s5 = inlined_call_operand.hbm [shape: f32[256,128], index: 5, kind: output, shape index: {}]
  %s6 = sld [smem:[#allocation0]]
  $region53: #{tpu_custom_call.1} parent=0
    _
  %s8 = ssub.s32 1, %s6
  %s9 = scalar_select 0, %s8, %s6
  $region1: #{tpu_custom_call.1} parent=0
    #allocation2 [shape = 'u8[131072]{0}', space=vmem, size = 0x20000, scoped, tag = 'output window, operand 0']
    #allocation3 [shape = 's32[2]{0}', space=sflag, size = 0x8, scoped, tag = 'scoped memory for tpu_custom_call.1']
    %10 = vsyncpa [#allocation3], 0
    %s11 = scalar_lea.sflag [#allocation3], 1
    %12 = vsyncpa %s11, 0
    loop: start=0, step=1, limit=4
    $region2: #{tpu_custom_call.1} parent=1 // loop_pre_header
      _
    $region3: #{tpu_custom_call.1} parent=1 // loop_header
      %s14 = sphi 0, %s18
      %p15 = scmp.ge.s32.totalorder %s14, 4
      %s24 = sphi 0, %s26
      %s27 = sphi 0, %s24
      %s28 = sphi 0, %s27
      %s44 = sphi 0, %s28
      %s48 = sphi 0, %s48
      %s50 = sphi 0, %s48
      %s51 = sphi 0, %s50
      %s65 = sphi 0, %s51
      %s69 = sphi 0, %s69
      %s71 = sphi 0, %s69
      %s72 = sphi 0, %s71
      %s86 = sphi 0, %s72
      %s90 = sphi 0, %s90
      %s92 = sphi 0, %s90
      %s93 = sphi 0, %s92
      %s107 = sphi 0, %s93
      %s111 = sphi 0, %s111
      %s113 = sphi 0, %s111
      %s114 = sphi 0, %s113
      %s128 = sphi 0, %s114
      %s134 = sphi 0, %s136
      %s137 = sphi 0, %s134
      %s138 = sphi 0, %s137
      %s154 = sphi 0, %s138
    $region4: #{tpu_custom_call.1} parent=1 // loop_header_branch
      %17 = sbr.rel (%p15) target = $region8
    $region5: #{tpu_custom_call.1} parent=1 // loop_body
      %s19 = ssub.s32 %s14, 1
      %s20 = ssub.s32 %s14, 2
      %s21 = sadd.s32 %s14, 1
      %s22 = ssub.s32 %s14, %s21
      %p23 = scmp.eq.s32.totalorder %s22, 0
      %s25 = sadd.s32 %s24, 1
      %s26 = scalar_select %p23, %s24, %s25
      %p29 = pneg %p23
      %p30 = scmp.eq.s32.totalorder %s14, 1
      %p31 = por %p29, %p30
      %p32 = scmp.ne.s32.totalorder %s24, %s27
      %p33 = scmp.eq.s32.totalorder %s14, 0
      %p34 = por %p32, %p33
      %p35 = scmp.ne.s32.totalorder %s24, %s27
      %p36 = scmp.eq.s32.totalorder %s19, 1
      %p37 = por %p35, %p36
      %p38 = scmp.ne.s32.totalorder %s27, %s28
      %p39 = scmp.eq.s32.totalorder %s19, 0
      %p40 = por %p38, %p39
      %p41 = scmp.ne.s32.totalorder %s27, %s28
      %p42 = scmp.eq.s32.totalorder %s20, 1
      %p43 = por %p41, %p42
      %p45 = scmp.ne.s32.totalorder %s28, %s44
      %p46 = scmp.eq.s32.totalorder %s20, 0
      %p47 = por %p45, %p46
      %s49 = sadd.s32 %s48, 1
      %p52 = scmp.eq.s32.totalorder %s14, 1
      %p53 = scmp.ne.s32.totalorder %s48, %s50
      %p54 = scmp.eq.s32.totalorder %s14, 0
      %p55 = por %p53, %p54
      %p56 = scmp.ne.s32.totalorder %s48, %s50
      %p57 = scmp.eq.s32.totalorder %s19, 1
      %p58 = por %p56, %p57
      %p59 = scmp.ne.s32.totalorder %s50, %s51
      %p60 = scmp.eq.s32.totalorder %s19, 0
      %p61 = por %p59, %p60
      %p62 = scmp.ne.s32.totalorder %s50, %s51
      %p63 = scmp.eq.s32.totalorder %s20, 1
      %p64 = por %p62, %p63
      %p66 = scmp.ne.s32.totalorder %s51, %s65
      %p67 = scmp.eq.s32.totalorder %s20, 0
      %p68 = por %p66, %p67
      %s70 = sadd.s32 %s69, 1
      %p73 = scmp.eq.s32.totalorder %s14, 1
      %p74 = scmp.ne.s32.totalorder %s69, %s71
      %p75 = scmp.eq.s32.totalorder %s14, 0
      %p76 = por %p74, %p75
      %p77 = scmp.ne.s32.totalorder %s69, %s71
      %p78 = scmp.eq.s32.totalorder %s19, 1
      %p79 = por %p77, %p78
      %p80 = scmp.ne.s32.totalorder %s71, %s72
      %p81 = scmp.eq.s32.totalorder %s19, 0
      %p82 = por %p80, %p81
      %p83 = scmp.ne.s32.totalorder %s71, %s72
      %p84 = scmp.eq.s32.totalorder %s20, 1
      %p85 = por %p83, %p84
      %p87 = scmp.ne.s32.totalorder %s72, %s86
      %p88 = scmp.eq.s32.totalorder %s20, 0
      %p89 = por %p87, %p88
      %s91 = sadd.s32 %s90, 1
      %p94 = scmp.eq.s32.totalorder %s14, 1
      %p95 = scmp.ne.s32.totalorder %s90, %s92
      %p96 = scmp.eq.s32.totalorder %s14, 0
      %p97 = por %p95, %p96
      %p98 = scmp.ne.s32.totalorder %s90, %s92
      %p99 = scmp.eq.s32.totalorder %s19, 1
      %p100 = por %p98, %p99
      %p101 = scmp.ne.s32.totalorder %s92, %s93
      %p102 = scmp.eq.s32.totalorder %s19, 0
      %p103 = por %p101, %p102
      %p104 = scmp.ne.s32.totalorder %s92, %s93
      %p105 = scmp.eq.s32.totalorder %s20, 1
      %p106 = por %p104, %p105
      %p108 = scmp.ne.s32.totalorder %s93, %s107
      %p109 = scmp.eq.s32.totalorder %s20, 0
      %p110 = por %p108, %p109
      %s112 = sadd.s32 %s111, 1
      %p115 = scmp.eq.s32.totalorder %s14, 1
      %p116 = scmp.ne.s32.totalorder %s111, %s113
      %p117 = scmp.eq.s32.totalorder %s14, 0
      %p118 = por %p116, %p117
      %p119 = scmp.ne.s32.totalorder %s111, %s113
      %p120 = scmp.eq.s32.totalorder %s19, 1
      %p121 = por %p119, %p120
      %p122 = scmp.ne.s32.totalorder %s113, %s114
      %p123 = scmp.eq.s32.totalorder %s19, 0
      %p124 = por %p122, %p123
      %p125 = scmp.ne.s32.totalorder %s113, %s114
      %p126 = scmp.eq.s32.totalorder %s20, 1
      %p127 = por %p125, %p126
      %p129 = scmp.ne.s32.totalorder %s114, %s128
      %p130 = scmp.eq.s32.totalorder %s20, 0
      %p131 = por %p129, %p130
      %s132 = ssub.s32 %s14, %s21
      %p133 = scmp.eq.s32.totalorder %s132, 0
      %s135 = sadd.s32 %s134, 1
      %s136 = scalar_select %p133, %s134, %s135
      %p139 = pneg %p133
      %p140 = scmp.eq.s32.totalorder %s14, 1
      %p141 = por %p139, %p140
      %p142 = scmp.ne.s32.totalorder %s134, %s137
      %p143 = scmp.eq.s32.totalorder %s14, 0
      %p144 = por %p142, %p143
      %p145 = scmp.ne.s32.totalorder %s134, %s137
      %p146 = scmp.eq.s32.totalorder %s19, 1
      %p147 = por %p145, %p146
      %p148 = scmp.ne.s32.totalorder %s137, %s138
      %p149 = scmp.eq.s32.totalorder %s19, 0
      %p150 = por %p148, %p149
      %p151 = scmp.ne.s32.totalorder %s137, %s138
      %p152 = scmp.eq.s32.totalorder %s20, 1
      %p153 = por %p151, %p152
      %p155 = scmp.ne.s32.totalorder %s138, %s154
      %p156 = scmp.eq.s32.totalorder %s20, 0
      %p157 = por %p155, %p156
      %p158 = scmp.le.s32.totalorder 1, %s14
      %p159 = scmp.lt.s32.totalorder %s14, 3
      %p160 = pnand %p158, %p159
      %p161 = pneg %p160
      // Predicated region
      $region9: #{tpu_custom_call.1} parent=5 // pred_check
        _
      $region10: #{tpu_custom_call.1} parent=5 // pred_check_branch
        %163 = sbr.rel (%p160) target = $region12
      $region11: #{tpu_custom_call.1} parent=5 // pred_region
        %s164 = ssub.s32 %s14, 1
        // Predicated region
        $region13: #{tpu_custom_call.1} parent=11 // pred_check
          %p165 = pneg %p61
        $region14: #{tpu_custom_call.1} parent=11 // pred_check_branch
          %167 = sbr.rel (%p165) target = $region16
        $region15: #{tpu_custom_call.1} parent=11 // pred_region
          _
        $region16: #{tpu_custom_call.1} parent=11 // pred_fallthru
          _
        // Predicated region
        $region17: #{tpu_custom_call.1} parent=11 // pred_check
          %p168 = pneg %p82
        $region18: #{tpu_custom_call.1} parent=11 // pred_check_branch
          %170 = sbr.rel (%p168) target = $region20
        $region19: #{tpu_custom_call.1} parent=11 // pred_region
          _
        $region20: #{tpu_custom_call.1} parent=11 // pred_fallthru
          _
        // Predicated region
        $region21: #{tpu_custom_call.1} parent=11 // pred_check
          %p171 = pneg %p103
        $region22: #{tpu_custom_call.1} parent=11 // pred_check_branch
          %173 = sbr.rel (%p171) target = $region24
        $region23: #{tpu_custom_call.1} parent=11 // pred_region
          _
        $region24: #{tpu_custom_call.1} parent=11 // pred_fallthru
          _
        // Predicated region
        $region25: #{tpu_custom_call.1} parent=11 // pred_check
          %p174 = pneg %p124
        $region26: #{tpu_custom_call.1} parent=11 // pred_check_branch
          %176 = sbr.rel (%p174) target = $region28
        $region27: #{tpu_custom_call.1} parent=11 // pred_region
          _
        $region28: #{tpu_custom_call.1} parent=11 // pred_fallthru
          _
      $region12: #{tpu_custom_call.1} parent=5 // pred_fallthru
        _
      %p177 = scmp.lt.s32.totalorder %s14, 2
      // Predicated region
      $region29: #{tpu_custom_call.1} parent=5 // pred_check
        %p178 = pneg %p177
      $region30: #{tpu_custom_call.1} parent=5 // pred_check_branch
        %180 = sbr.rel (%p178) target = $region32
      $region31: #{tpu_custom_call.1} parent=5 // pred_region
        // Predicated region
        $region33: #{tpu_custom_call.1} parent=31 // pred_check
          %p181 = pneg %p34
        $region34: #{tpu_custom_call.1} parent=31 // pred_check_branch
          %183 = sbr.rel (%p181) target = $region36
        $region35: #{tpu_custom_call.1} parent=31 // pred_region
          %s184 = smul.u32 16, %s14
          %p185 = scmp.lt.s32.totalorder %s184, 31
          %s186 = scalar_select %p185, %s184, 31
          %s187 = smul.addr %s186, 8
          %s188 = scalar_lea.vmem %s0, %s187
          %s189 = smul.u32 16, %s14
        $region36: #{tpu_custom_call.1} parent=31 // pred_fallthru
          _
      $region32: #{tpu_custom_call.1} parent=5 // pred_fallthru
        _
      %p190 = scmp.le.s32.totalorder 1, %s14
      %p191 = scmp.lt.s32.totalorder %s14, 3
      %p192 = pnand %p190, %p191
      %p193 = pneg %p192
      // Predicated region
      $region37: #{tpu_custom_call.1} parent=5 // pred_check
        _
      $region38: #{tpu_custom_call.1} parent=5 // pred_check_branch
        %195 = sbr.rel (%p192) target = $region40
      $region39: #{tpu_custom_call.1} parent=5 // pred_region
        %s196 = ssub.s32 %s14, 1
        %s197 = smul.u32 16, %s19
        %p198 = scmp.lt.s32.totalorder %s197, 31
        %s199 = scalar_select %p198, %s197, 31
        %s200 = smul.addr %s199, 8
        %s201 = scalar_lea.vmem %s0, %s200
        %p202 = pneg %p40
        %p203 = pneg %p37
        %p204 = pneg %p61
        %p205 = pneg %p58
        %p206 = pneg %p82
        %p207 = pneg %p79
        %p208 = pneg %p103
        %p209 = pneg %p100
        %p210 = pneg %p124
        %p211 = pneg %p121
        %p212 = pneg %p150
        %p213 = pneg %p147
        %s214 = sand.u32 %s137, 1
        %s215 = scalar_lea.sflag [#allocation3], %s214
        %s216 = sand.u32 %s137, 1
        %s217 = smul.addr %s216, 128
        %s218 = scalar_lea.vmem [#allocation2], %s217
        %s219 = smul.u32 16, %s19
        %p220 = scmp.lt.s32.totalorder %s219, 31
        %s221 = scalar_select %p220, %s219, 31
        %s222 = smul.addr %s221, 8
        %s223 = scalar_lea.vmem %s0, %s222
        %s224 = smul.u32 16, %s19
        %s225 = smul.u32 16, %s19
        %v226 = vld [vmem:[%s223] sm:$0xff]
        %v227 = vld [vmem:[%s223 + $0x8] sm:$0xff]
        %v228 = vld [vmem:[%s223 + $0x10] sm:$0xff]
        %v229 = vld [vmem:[%s223 + $0x18] sm:$0xff]
        %v230 = vld [vmem:[%s223 + $0x20] sm:$0xff]
        %v231 = vld [vmem:[%s223 + $0x28] sm:$0xff]
        %v232 = vld [vmem:[%s223 + $0x30] sm:$0xff]
        %v233 = vld [vmem:[%s223 + $0x38] sm:$0xff]
        %v234 = vld [vmem:[%s223 + $0x40] sm:$0xff]
        %v235 = vld [vmem:[%s223 + $0x48] sm:$0xff]
        %v236 = vld [vmem:[%s223 + $0x50] sm:$0xff]
        %v237 = vld [vmem:[%s223 + $0x58] sm:$0xff]
        %v238 = vld [vmem:[%s223 + $0x60] sm:$0xff]
        %v239 = vld [vmem:[%s223 + $0x68] sm:$0xff]
        %v240 = vld [vmem:[%s223 + $0x70] sm:$0xff]
        %v241 = vld [vmem:[%s223 + $0x78] sm:$0xff]
        %v242 = vld [vmem:[%s4] sm:$0x3]
        %v243 = vld [vmem:[%s4 + $0x2] sm:$0x1]
        %v244 = vld [vmem:[%s4 + $0x3] sm:$0x1]
        %v245 = vld [vmem:[%s4 + $0x4] sm:$0x1]
        %v246 = vld [vmem:[%s3] sm:$0xff]
        %v247 = vld [vmem:[%s3 + $0x18] sm:$0xff]
        %v248 = vld [vmem:[%s3 + $0x30] sm:$0xff]
        %v249 = vld [vmem:[%s3 + $0x48] sm:$0xff]
        %v250 = vld [vmem:[%s3 + $0x8] sm:$0xff]
        %v251 = vld [vmem:[%s3 + $0x20] sm:$0xff]
        %v252 = vld [vmem:[%s3 + $0x38] sm:$0xff]
        %v253 = vld [vmem:[%s3 + $0x50] sm:$0xff]
        %v254 = vld [vmem:[%s3 + $0x10] sm:$0xff]
        %v255 = vld [vmem:[%s3 + $0x28] sm:$0xff]
        %v256 = vld [vmem:[%s3 + $0x40] sm:$0xff]
        %v257 = vld [vmem:[%s3 + $0x58] sm:$0xff]
        %v258 = vld [vmem:[%s1] sm:$0xff]
        %v259 = vld [vmem:[%s1 + $0x8] sm:$0xff]
        %v260 = vld [vmem:[%s1 + $0x10] sm:$0xff]
        %v261 = vld [vmem:[%s1 + $0x18] sm:$0xff]
        %v262 = vld [vmem:[%s1 + $0x20] sm:$0xff]
        %v263 = vld [vmem:[%s1 + $0x28] sm:$0xff]
        %v264 = vld [vmem:[%s1 + $0x30] sm:$0xff]
        %v265 = vld [vmem:[%s1 + $0x38] sm:$0xff]
        %v267 = vlaneseq
        %v268 = vshrl.u32 %v267, 7
        %v269 = vsub.s32 0, %v268
        %v270 = vrot.slane %v242, %v269
        %v271 = vlaneseq
        %v272 = vshrl.u32 %v271, 7
        %v273 = vsub.s32 1, %v272
        %v274 = vrot.slane %v242, %v273
        %vm277 = vcmask 261120
        %v279 = vsel %vm277, %v226, 0
        %v282 = vsel %vm277, %v227, 0
        %v285 = vsel %vm277, %v228, 0
        %v288 = vsel %vm277, %v229, 0
        %v291 = vsel %vm277, %v230, 0
        %v294 = vsel %vm277, %v231, 0
        %v297 = vsel %vm277, %v232, 0
        %v300 = vsel %vm277, %v233, 0
        %v303 = vsel %vm277, %v234, 0
        %v306 = vsel %vm277, %v235, 0
        %v309 = vsel %vm277, %v236, 0
        %v312 = vsel %vm277, %v237, 0
        %v315 = vsel %vm277, %v238, 0
        %v318 = vsel %vm277, %v239, 0
        %v321 = vsel %vm277, %v240, 0
        %v324 = vsel %vm277, %v241, 0
        %326 = vmatprep.subr.mxu0 %v259
        %327 = vmatpush1.msra.mxu0 %v258
        %328 = vmatprep.subr.mxu0 %v261
        %329 = vmatpush1.msra.mxu0 %v260
        %330 = vmatprep.subr.mxu0 %v263
        %331 = vmatpush1.msra.mxu0 %v262
        %332 = vmatprep.subr.mxu0 %v265
        %333 = vmatpush1.msra.mxu0 %v264
        %334 = vmatprep.subr.mxu0 0.0
        %335 = vmatpush1.msra.mxu0 0.0
        %336 = vmatprep.subr.mxu0 0.0
        %337 = vmatpush1.msra.mxu0 0.0
        %338 = vmatprep.subr.mxu0 0.0
        %339 = vmatpush1.msra.mxu0 0.0
        %340 = vmatprep.subr.mxu0 0.0
        %341 = vmatpush1.msra.mxu0 0.0
        %342 = vmatprep.subr.mxu0 0.0
        %343 = vmatpush1.msra.mxu0 0.0
        %344 = vmatprep.subr.mxu0 0.0
        %345 = vmatpush1.msra.mxu0 0.0
        %346 = vmatprep.subr.mxu0 0.0
        %347 = vmatpush1.msra.mxu0 0.0
        %348 = vmatprep.subr.mxu0 0.0
        %349 = vmatpush1.msra.mxu0 0.0
        %350 = vmatprep.subr.mxu0 0.0
        %351 = vmatpush1.msra.mxu0 0.0
        %352 = vmatprep.subr.mxu0 0.0
        %353 = vmatpush1.msra.mxu0 0.0
        %354 = vmatprep.subr.mxu0 0.0
        %355 = vmatpush1.msra.mxu0 0.0
        %356 = vmatprep.subr.mxu0 0.0
        %357 = vmatpush1.msra.mxu0 0.0
        %358 = vmatprep.subr.mxu0 0.0
        %359 = vmatpush1.msra.mxu0 0.0
        %360 = vmatprep.subr.mxu0 0.0
        %361 = vmatpush1.msra.mxu0 0.0
        %362 = vmatprep.subr.mxu0 0.0
        %363 = vmatpush1.msra.mxu0 0.0
        %364 = vmatprep.subr.mxu0 0.0
        %365 = vmatpush1.msra.mxu0 0.0
        %366 = vmatprep.subr.mxu0 0.0
        %367 = vmatpush1.msra.mxu0 0.0
        %368 = vmatprep.subr.mxu0 0.0
        %369 = vmatpush1.msra.mxu0 0.0
        %370 = vmatprep.subr.mxu0 0.0
        %371 = vmatpush1.msra.mxu0 0.0
        %372 = vmatprep.subr.mxu0 0.0
        %373 = vmatpush1.msra.mxu0 0.0
        %374 = vmatprep.subr.mxu0 0.0
        %375 = vmatpush1.msra.mxu0 0.0
        %376 = vmatprep.subr.mxu0 0.0
        %377 = vmatpush1.msra.mxu0 0.0
        %378 = vmatprep.subr.mxu0 0.0
        %379 = vmatpush1.msra.mxu0 0.0
        %380 = vmatprep.subr.mxu0 0.0
        %381 = vmatpush1.msra.mxu0 0.0
        %382 = vmatprep.subr.mxu0 0.0
        %383 = vmatpush1.msra.mxu0 0.0
        %384 = vmatprep.subr.mxu0 0.0
        %385 = vmatpush1.msra.mxu0 0.0
        %386 = vmatprep.subr.mxu0 0.0
        %387 = vmatpush1.msra.mxu0 0.0
        %388 = vmatprep.subr.mxu0 0.0
        %389 = vmatpush1.msra.mxu0 0.0
        %390 = vmatprep.mubr.f32.mxu0 0.0
        %391 = vmatmul.mubr.f32.gmra.mrb[0].mxu0 %v279
        %v392 = vpop.f32.mrb[0].mxu0
        %v393 = vadd.f32 %v270, %v392
        %v394 = vpop.f32.mrb[0].mxu0
        %v395 = vadd.f32 %v274, %v394
        %396 = vmatprep.mubr.f32.mxu0 0.0
        %397 = vmatmul.mubr.f32.gmra.mrb[0].mxu0 %v282
        %v398 = vpop.f32.mrb[0].mxu0
        %v399 = vadd.f32 %v270, %v398
        %v400 = vpop.f32.mrb[0].mxu0
        %v401 = vadd.f32 %v274, %v400
        %402 = vmatprep.mubr.f32.mxu0 0.0
        %403 = vmatmul.mubr.f32.gmra.mrb[0].mxu0 %v285
        %v404 = vpop.f32.mrb[0].mxu0
        %v405 = vadd.f32 %v270, %v404
        %v406 = vpop.f32.mrb[0].mxu0
        %v407 = vadd.f32 %v274, %v406
        %408 = vmatprep.mubr.f32.mxu0 0.0
        %409 = vmatmul.mubr.f32.gmra.mrb[0].mxu0 %v288
        %v410 = vpop.f32.mrb[0].mxu0
        %v411 = vadd.f32 %v270, %v410
        %v412 = vpop.f32.mrb[0].mxu0
        %v413 = vadd.f32 %v274, %v412
        %414 = vmatprep.mubr.f32.mxu0 0.0
        %415 = vmatmul.mubr.f32.gmra.mrb[0].mxu0 %v291
        %v416 = vpop.f32.mrb[0].mxu0
        %v417 = vadd.f32 %v270, %v416
        %v418 = vpop.f32.mrb[0].mxu0
        %v419 = vadd.f32 %v274, %v418
        %420 = vmatprep.mubr.f32.mxu0 0.0
        %421 = vmatmul.mubr.f32.gmra.mrb[0].mxu0 %v294
        %v422 = vpop.f32.mrb[0].mxu0
        %v423 = vadd.f32 %v270, %v422
        %v424 = vpop.f32.mrb[0].mxu0
        %v425 = vadd.f32 %v274, %v424
        %426 = vmatprep.mubr.f32.mxu0 0.0
        %427 = vmatmul.mubr.f32.gmra.mrb[0].mxu0 %v297
        %v428 = vpop.f32.mrb[0].mxu0
        %v429 = vadd.f32 %v270, %v428
        %v430 = vpop.f32.mrb[0].mxu0
        %v431 = vadd.f32 %v274, %v430
        %432 = vmatprep.mubr.f32.mxu0 0.0
        %433 = vmatmul.mubr.f32.gmra.mrb[0].mxu0 %v300
        %v434 = vpop.f32.mrb[0].mxu0
        %v435 = vadd.f32 %v270, %v434
        %v436 = vpop.f32.mrb[0].mxu0
        %v437 = vadd.f32 %v274, %v436
        %438 = vmatprep.mubr.f32.mxu0 0.0
        %439 = vmatmul.mubr.f32.gmra.mrb[0].mxu0 %v303
        %v440 = vpop.f32.mrb[0].mxu0
        %v441 = vadd.f32 %v270, %v440
        %v442 = vpop.f32.mrb[0].mxu0
        %v443 = vadd.f32 %v274, %v442
        %444 = vmatprep.mubr.f32.mxu0 0.0
        %445 = vmatmul.mubr.f32.gmra.mrb[0].mxu0 %v306
        %v446 = vpop.f32.mrb[0].mxu0
        %v447 = vadd.f32 %v270, %v446
        %v448 = vpop.f32.mrb[0].mxu0
        %v449 = vadd.f32 %v274, %v448
        %450 = vmatprep.mubr.f32.mxu0 0.0
        %451 = vmatmul.mubr.f32.gmra.mrb[0].mxu0 %v309
        %v452 = vpop.f32.mrb[0].mxu0
        %v453 = vadd.f32 %v270, %v452
        %v454 = vpop.f32.mrb[0].mxu0
        %v455 = vadd.f32 %v274, %v454
        %456 = vmatprep.mubr.f32.mxu0 0.0
        %457 = vmatmul.mubr.f32.gmra.mrb[0].mxu0 %v312
        %v458 = vpop.f32.mrb[0].mxu0
        %v459 = vadd.f32 %v270, %v458
        %v460 = vpop.f32.mrb[0].mxu0
        %v461 = vadd.f32 %v274, %v460
        %462 = vmatprep.mubr.f32.mxu0 0.0
        %463 = vmatmul.mubr.f32.gmra.mrb[0].mxu0 %v315
        %v464 = vpop.f32.mrb[0].mxu0
        %v465 = vadd.f32 %v270, %v464
        %v466 = vpop.f32.mrb[0].mxu0
        %v467 = vadd.f32 %v274, %v466
        %468 = vmatprep.mubr.f32.mxu0 0.0
        %469 = vmatmul.mubr.f32.gmra.mrb[0].mxu0 %v318
        %v470 = vpop.f32.mrb[0].mxu0
        %v471 = vadd.f32 %v270, %v470
        %v472 = vpop.f32.mrb[0].mxu0
        %v473 = vadd.f32 %v274, %v472
        %474 = vmatprep.mubr.f32.mxu0 0.0
        %475 = vmatmul.mubr.f32.gmra.mrb[0].mxu0 %v321
        %v476 = vpop.f32.mrb[0].mxu0
        %v477 = vadd.f32 %v270, %v476
        %v478 = vpop.f32.mrb[0].mxu0
        %v479 = vadd.f32 %v274, %v478
        %480 = vmatprep.mubr.f32.mxu0 0.0
        %481 = vmatmul.mubr.f32.gmra.mrb[0].mxu0 %v324
        %v482 = vpop.f32.mrb[0].mxu0
        %v483 = vadd.f32 %v270, %v482
        %v484 = vpop.f32.mrb[0].mxu0
        %v485 = vadd.f32 %v274, %v484
        %486 = vdwg.mxu0
        %v487 = vmax.f32 %v393, 0.0
        %v488 = vmax.f32 %v395, 0.0
        %v489 = vmax.f32 %v399, 0.0
        %v490 = vmax.f32 %v401, 0.0
        %v491 = vmax.f32 %v405, 0.0
        %v492 = vmax.f32 %v407, 0.0
        %v493 = vmax.f32 %v411, 0.0
        %v494 = vmax.f32 %v413, 0.0
        %v495 = vmax.f32 %v417, 0.0
        %v496 = vmax.f32 %v419, 0.0
        %v497 = vmax.f32 %v423, 0.0
        %v498 = vmax.f32 %v425, 0.0
        %v499 = vmax.f32 %v429, 0.0
        %v500 = vmax.f32 %v431, 0.0
        %v501 = vmax.f32 %v435, 0.0
        %v502 = vmax.f32 %v437, 0.0
        %v503 = vmax.f32 %v441, 0.0
        %v504 = vmax.f32 %v443, 0.0
        %v505 = vmax.f32 %v447, 0.0
        %v506 = vmax.f32 %v449, 0.0
        %v507 = vmax.f32 %v453, 0.0
        %v508 = vmax.f32 %v455, 0.0
        %v509 = vmax.f32 %v459, 0.0
        %v510 = vmax.f32 %v461, 0.0
        %v511 = vmax.f32 %v465, 0.0
        %v512 = vmax.f32 %v467, 0.0
        %v513 = vmax.f32 %v471, 0.0
        %v514 = vmax.f32 %v473, 0.0
        %v515 = vmax.f32 %v477, 0.0
        %v516 = vmax.f32 %v479, 0.0
        %v517 = vmax.f32 %v483, 0.0
        %v518 = vmax.f32 %v485, 0.0
        %v519 = vmul.f32 %v487, %v487
        %v520 = vmul.f32 %v488, %v488
        %v521 = vmul.f32 %v489, %v489
        %v522 = vmul.f32 %v490, %v490
        %v523 = vmul.f32 %v491, %v491
        %v524 = vmul.f32 %v492, %v492
        %v525 = vmul.f32 %v493, %v493
        %v526 = vmul.f32 %v494, %v494
        %v527 = vmul.f32 %v495, %v495
        %v528 = vmul.f32 %v496, %v496
        %v529 = vmul.f32 %v497, %v497
        %v530 = vmul.f32 %v498, %v498
        %v531 = vmul.f32 %v499, %v499
        %v532 = vmul.f32 %v500, %v500
        %v533 = vmul.f32 %v501, %v501
        %v534 = vmul.f32 %v502, %v502
        %v535 = vmul.f32 %v503, %v503
        %v536 = vmul.f32 %v504, %v504
        %v537 = vmul.f32 %v505, %v505
        %v538 = vmul.f32 %v506, %v506
        %v539 = vmul.f32 %v507, %v507
        %v540 = vmul.f32 %v508, %v508
        %v541 = vmul.f32 %v509, %v509
        %v542 = vmul.f32 %v510, %v510
        %v543 = vmul.f32 %v511, %v511
        %v544 = vmul.f32 %v512, %v512
        %v545 = vmul.f32 %v513, %v513
        %v546 = vmul.f32 %v514, %v514
        %v547 = vmul.f32 %v515, %v515
        %v548 = vmul.f32 %v516, %v516
        %v549 = vmul.f32 %v517, %v517
        %v550 = vmul.f32 %v518, %v518
        %v551 = vld [vmem:[%s2] sm:$0xff]
        %v552 = vld [vmem:[%s2 + $0x8] sm:$0xff]
        %v553 = vld [vmem:[%s2 + $0x10] sm:$0xff]
        %v554 = vld [vmem:[%s2 + $0x18] sm:$0xff]
        %v555 = vld [vmem:[%s2 + $0x20] sm:$0xff]
        %v556 = vld [vmem:[%s2 + $0x28] sm:$0xff]
        %v557 = vld [vmem:[%s2 + $0x30] sm:$0xff]
        %v558 = vld [vmem:[%s2 + $0x38] sm:$0xff]
        %v559 = vld [vmem:[%s2 + $0x40] sm:$0xff]
        %v560 = vld [vmem:[%s2 + $0x48] sm:$0xff]
        %v561 = vld [vmem:[%s2 + $0x50] sm:$0xff]
        %v562 = vld [vmem:[%s2 + $0x58] sm:$0xff]
        %v563 = vld [vmem:[%s2 + $0x60] sm:$0xff]
        %v564 = vld [vmem:[%s2 + $0x68] sm:$0xff]
        %v565 = vld [vmem:[%s2 + $0x70] sm:$0xff]
        %v566 = vld [vmem:[%s2 + $0x78] sm:$0xff]
        %v567 = vld [vmem:[%s2 + $0x80] sm:$0xff]
        %v568 = vld [vmem:[%s2 + $0x88] sm:$0xff]
        %v569 = vld [vmem:[%s2 + $0x90] sm:$0xff]
        %v570 = vld [vmem:[%s2 + $0x98] sm:$0xff]
        %v571 = vld [vmem:[%s2 + $0xa0] sm:$0xff]
        %v572 = vld [vmem:[%s2 + $0xa8] sm:$0xff]
        %v573 = vld [vmem:[%s2 + $0xb0] sm:$0xff]
        %v574 = vld [vmem:[%s2 + $0xb8] sm:$0xff]
        %v575 = vld [vmem:[%s2 + $0xc0] sm:$0xff]
        %v576 = vld [vmem:[%s2 + $0xc8] sm:$0xff]
        %v577 = vld [vmem:[%s2 + $0xd0] sm:$0xff]
        %v578 = vld [vmem:[%s2 + $0xd8] sm:$0xff]
        %v579 = vld [vmem:[%s2 + $0xe0] sm:$0xff]
        %v580 = vld [vmem:[%s2 + $0xe8] sm:$0xff]
        %v581 = vld [vmem:[%s2 + $0xf0] sm:$0xff]
        %v582 = vld [vmem:[%s2 + $0xf8] sm:$0xff]
        %583 = vmatprep.subr.mxu0 0.0
        %584 = vmatpush1.msra.mxu0 %v551
        %585 = vmatprep.subr.mxu0 0.0
        %586 = vmatpush1.msra.mxu0 %v552
        %587 = vmatprep.subr.mxu0 0.0
        %588 = vmatpush1.msra.mxu0 %v553
        %589 = vmatprep.subr.mxu0 0.0
        %590 = vmatpush1.msra.mxu0 %v554
        %591 = vmatprep.subr.mxu0 0.0
        %592 = vmatpush1.msra.mxu0 %v555
        %593 = vmatprep.subr.mxu0 0.0
        %594 = vmatpush1.msra.mxu0 %v556
        %595 = vmatprep.subr.mxu0 0.0
        %596 = vmatpush1.msra.mxu0 %v557
        %597 = vmatprep.subr.mxu0 0.0
        %598 = vmatpush1.msra.mxu0 %v558
        %599 = vmatprep.subr.mxu0 0.0
        %600 = vmatpush1.msra.mxu0 %v559
        %601 = vmatprep.subr.mxu0 0.0
        %602 = vmatpush1.msra.mxu0 %v560
        %603 = vmatprep.subr.mxu0 0.0
        %604 = vmatpush1.msra.mxu0 %v561
        %605 = vmatprep.subr.mxu0 0.0
        %606 = vmatpush1.msra.mxu0 %v562
        %607 = vmatprep.subr.mxu0 0.0
        %608 = vmatpush1.msra.mxu0 %v563
        %609 = vmatprep.subr.mxu0 0.0
        %610 = vmatpush1.msra.mxu0 %v564
        %611 = vmatprep.subr.mxu0 0.0
        %612 = vmatpush1.msra.mxu0 %v565
        %613 = vmatprep.subr.mxu0 0.0
        %614 = vmatpush1.msra.mxu0 %v566
        %615 = vmatprep.subr.mxu0 0.0
        %616 = vmatpush1.msra.mxu0 %v567
        %617 = vmatprep.subr.mxu0 0.0
        %618 = vmatpush1.msra.mxu0 %v568
        %619 = vmatprep.subr.mxu0 0.0
        %620 = vmatpush1.msra.mxu0 %v569
        %621 = vmatprep.subr.mxu0 0.0
        %622 = vmatpush1.msra.mxu0 %v570
        %623 = vmatprep.subr.mxu0 0.0
        %624 = vmatpush1.msra.mxu0 %v571
        %625 = vmatprep.subr.mxu0 0.0
        %626 = vmatpush1.msra.mxu0 %v572
        %627 = vmatprep.subr.mxu0 0.0
        %628 = vmatpush1.msra.mxu0 %v573
        %629 = vmatprep.subr.mxu0 0.0
        %630 = vmatpush1.msra.mxu0 %v574
        %631 = vmatprep.subr.mxu0 0.0
        %632 = vmatpush1.msra.mxu0 %v575
        %633 = vmatprep.subr.mxu0 0.0
        %634 = vmatpush1.msra.mxu0 %v576
        %635 = vmatprep.subr.mxu0 0.0
        %636 = vmatpush1.msra.mxu0 %v577
        %637 = vmatprep.subr.mxu0 0.0
        %638 = vmatpush1.msra.mxu0 %v578
        %639 = vmatprep.subr.mxu0 0.0
        %640 = vmatpush1.msra.mxu0 %v579
        %641 = vmatprep.subr.mxu0 0.0
        %642 = vmatpush1.msra.mxu0 %v580
        %643 = vmatprep.subr.mxu0 0.0
        %644 = vmatpush1.msra.mxu0 %v581
        %645 = vmatprep.subr.mxu0 0.0
        %646 = vmatpush1.msra.mxu0 %v582
        %647 = vmatprep.mubr.f32.mxu0 %v520
        %648 = vmatmul.mubr.f32.gmra.mrb[0].mxu0 %v519
        %v649 = vpop.f32.mrb[0].mxu0
        %v650 = vadd.f32 0.0, %v649
        %v651 = vpop.f32.mrb[0].mxu0
        %652 = vmatprep.mubr.f32.mxu0 %v522
        %653 = vmatmul.mubr.f32.gmra.mrb[0].mxu0 %v521
        %v654 = vpop.f32.mrb[0].mxu0
        %v655 = vadd.f32 0.0, %v654
        %v656 = vpop.f32.mrb[0].mxu0
        %657 = vmatprep.mubr.f32.mxu0 %v524
        %658 = vmatmul.mubr.f32.gmra.mrb[0].mxu0 %v523
        %v659 = vpop.f32.mrb[0].mxu0
        %v660 = vadd.f32 0.0, %v659
        %v661 = vpop.f32.mrb[0].mxu0
        %662 = vmatprep.mubr.f32.mxu0 %v526
        %663 = vmatmul.mubr.f32.gmra.mrb[0].mxu0 %v525
        %v664 = vpop.f32.mrb[0].mxu0
        %v665 = vadd.f32 0.0, %v664
        %v666 = vpop.f32.mrb[0].mxu0
        %667 = vmatprep.mubr.f32.mxu0 %v528
        %668 = vmatmul.mubr.f32.gmra.mrb[0].mxu0 %v527
        %v669 = vpop.f32.mrb[0].mxu0
        %v670 = vadd.f32 0.0, %v669
        %v671 = vpop.f32.mrb[0].mxu0
        %672 = vmatprep.mubr.f32.mxu0 %v530
        %673 = vmatmul.mubr.f32.gmra.mrb[0].mxu0 %v529
        %v674 = vpop.f32.mrb[0].mxu0
        %v675 = vadd.f32 0.0, %v674
        %v676 = vpop.f32.mrb[0].mxu0
        %677 = vmatprep.mubr.f32.mxu0 %v532
        %678 = vmatmul.mubr.f32.gmra.mrb[0].mxu0 %v531
        %v679 = vpop.f32.mrb[0].mxu0
        %v680 = vadd.f32 0.0, %v679
        %v681 = vpop.f32.mrb[0].mxu0
        %682 = vmatprep.mubr.f32.mxu0 %v534
        %683 = vmatmul.mubr.f32.gmra.mrb[0].mxu0 %v533
        %v684 = vpop.f32.mrb[0].mxu0
        %v685 = vadd.f32 0.0, %v684
        %v686 = vpop.f32.mrb[0].mxu0
        %687 = vmatprep.mubr.f32.mxu0 %v536
        %688 = vmatmul.mubr.f32.gmra.mrb[0].mxu0 %v535
        %v689 = vpop.f32.mrb[0].mxu0
        %v690 = vadd.f32 0.0, %v689
        %v691 = vpop.f32.mrb[0].mxu0
        %692 = vmatprep.mubr.f32.mxu0 %v538
        %693 = vmatmul.mubr.f32.gmra.mrb[0].mxu0 %v537
        %v694 = vpop.f32.mrb[0].mxu0
        %v695 = vadd.f32 0.0, %v694
        %v696 = vpop.f32.mrb[0].mxu0
        %697 = vmatprep.mubr.f32.mxu0 %v540
        %698 = vmatmul.mubr.f32.gmra.mrb[0].mxu0 %v539
        %v699 = vpop.f32.mrb[0].mxu0
        %v700 = vadd.f32 0.0, %v699
        %v701 = vpop.f32.mrb[0].mxu0
        %702 = vmatprep.mubr.f32.mxu0 %v542
        %703 = vmatmul.mubr.f32.gmra.mrb[0].mxu0 %v541
        %v704 = vpop.f32.mrb[0].mxu0
        %v705 = vadd.f32 0.0, %v704
        %v706 = vpop.f32.mrb[0].mxu0
        %707 = vmatprep.mubr.f32.mxu0 %v544
        %708 = vmatmul.mubr.f32.gmra.mrb[0].mxu0 %v543
        %v709 = vpop.f32.mrb[0].mxu0
        %v710 = vadd.f32 0.0, %v709
        %v711 = vpop.f32.mrb[0].mxu0
        %712 = vmatprep.mubr.f32.mxu0 %v546
        %713 = vmatmul.mubr.f32.gmra.mrb[0].mxu0 %v545
        %v714 = vpop.f32.mrb[0].mxu0
        %v715 = vadd.f32 0.0, %v714
        %v716 = vpop.f32.mrb[0].mxu0
        %717 = vmatprep.mubr.f32.mxu0 %v548
        %718 = vmatmul.mubr.f32.gmra.mrb[0].mxu0 %v547
        %v719 = vpop.f32.mrb[0].mxu0
        %v720 = vadd.f32 0.0, %v719
        %v721 = vpop.f32.mrb[0].mxu0
        %722 = vmatprep.mubr.f32.mxu0 %v550
        %723 = vmatmul.mubr.f32.gmra.mrb[0].mxu0 %v549
        %v724 = vpop.f32.mrb[0].mxu0
        %v725 = vadd.f32 0.0, %v724
        %v726 = vpop.f32.mrb[0].mxu0
        %727 = vdwg.mxu0
        %v728 = vrsqrt.pop %v650
        %v729 = vmul.f32 %v650, %v728
        %vm730 = vcmp.eq.f32.partialorder %v650, inf
        %v731 = vsel %vm730, %v650, %v729
        %vm732 = vcmp.eq.f32.partialorder %v650, 0.0
        %v733 = vand.u32 %v650, 2147483648
        %v734 = vsel %vm732, %v733, %v731
        %v735 = vrsqrt.pop %v655
        %v736 = vmul.f32 %v655, %v735
        %vm737 = vcmp.eq.f32.partialorder %v655, inf
        %v738 = vsel %vm737, %v655, %v736
        %vm739 = vcmp.eq.f32.partialorder %v655, 0.0
        %v740 = vand.u32 %v655, 2147483648
        %v741 = vsel %vm739, %v740, %v738
        %v742 = vrsqrt.pop %v660
        %v743 = vmul.f32 %v660, %v742
        %vm744 = vcmp.eq.f32.partialorder %v660, inf
        %v745 = vsel %vm744, %v660, %v743
        %vm746 = vcmp.eq.f32.partialorder %v660, 0.0
        %v747 = vand.u32 %v660, 2147483648
        %v748 = vsel %vm746, %v747, %v745
        %v749 = vrsqrt.pop %v665
        %v750 = vmul.f32 %v665, %v749
        %vm751 = vcmp.eq.f32.partialorder %v665, inf
        %v752 = vsel %vm751, %v665, %v750
        %vm753 = vcmp.eq.f32.partialorder %v665, 0.0
        %v754 = vand.u32 %v665, 2147483648
        %v755 = vsel %vm753, %v754, %v752
        %v756 = vrsqrt.pop %v670
        %v757 = vmul.f32 %v670, %v756
        %vm758 = vcmp.eq.f32.partialorder %v670, inf
        %v759 = vsel %vm758, %v670, %v757
        %vm760 = vcmp.eq.f32.partialorder %v670, 0.0
        %v761 = vand.u32 %v670, 2147483648
        %v762 = vsel %vm760, %v761, %v759
        %v763 = vrsqrt.pop %v675
        %v764 = vmul.f32 %v675, %v763
        %vm765 = vcmp.eq.f32.partialorder %v675, inf
        %v766 = vsel %vm765, %v675, %v764
        %vm767 = vcmp.eq.f32.partialorder %v675, 0.0
        %v768 = vand.u32 %v675, 2147483648
        %v769 = vsel %vm767, %v768, %v766
        %v770 = vrsqrt.pop %v680
        %v771 = vmul.f32 %v680, %v770
        %vm772 = vcmp.eq.f32.partialorder %v680, inf
        %v773 = vsel %vm772, %v680, %v771
        %vm774 = vcmp.eq.f32.partialorder %v680, 0.0
        %v775 = vand.u32 %v680, 2147483648
        %v776 = vsel %vm774, %v775, %v773
        %v777 = vrsqrt.pop %v685
        %v778 = vmul.f32 %v685, %v777
        %vm779 = vcmp.eq.f32.partialorder %v685, inf
        %v780 = vsel %vm779, %v685, %v778
        %vm781 = vcmp.eq.f32.partialorder %v685, 0.0
        %v782 = vand.u32 %v685, 2147483648
        %v783 = vsel %vm781, %v782, %v780
        %v784 = vrsqrt.pop %v690
        %v785 = vmul.f32 %v690, %v784
        %vm786 = vcmp.eq.f32.partialorder %v690, inf
        %v787 = vsel %vm786, %v690, %v785
        %vm788 = vcmp.eq.f32.partialorder %v690, 0.0
        %v789 = vand.u32 %v690, 2147483648
        %v790 = vsel %vm788, %v789, %v787
        %v791 = vrsqrt.pop %v695
        %v792 = vmul.f32 %v695, %v791
        %vm793 = vcmp.eq.f32.partialorder %v695, inf
        %v794 = vsel %vm793, %v695, %v792
        %vm795 = vcmp.eq.f32.partialorder %v695, 0.0
        %v796 = vand.u32 %v695, 2147483648
        %v797 = vsel %vm795, %v796, %v794
        %v798 = vrsqrt.pop %v700
        %v799 = vmul.f32 %v700, %v798
        %vm800 = vcmp.eq.f32.partialorder %v700, inf
        %v801 = vsel %vm800, %v700, %v799
        %vm802 = vcmp.eq.f32.partialorder %v700, 0.0
        %v803 = vand.u32 %v700, 2147483648
        %v804 = vsel %vm802, %v803, %v801
        %v805 = vrsqrt.pop %v705
        %v806 = vmul.f32 %v705, %v805
        %vm807 = vcmp.eq.f32.partialorder %v705, inf
        %v808 = vsel %vm807, %v705, %v806
        %vm809 = vcmp.eq.f32.partialorder %v705, 0.0
        %v810 = vand.u32 %v705, 2147483648
        %v811 = vsel %vm809, %v810, %v808
        %v812 = vrsqrt.pop %v710
        %v813 = vmul.f32 %v710, %v812
        %vm814 = vcmp.eq.f32.partialorder %v710, inf
        %v815 = vsel %vm814, %v710, %v813
        %vm816 = vcmp.eq.f32.partialorder %v710, 0.0
        %v817 = vand.u32 %v710, 2147483648
        %v818 = vsel %vm816, %v817, %v815
        %v819 = vrsqrt.pop %v715
        %v820 = vmul.f32 %v715, %v819
        %vm821 = vcmp.eq.f32.partialorder %v715, inf
        %v822 = vsel %vm821, %v715, %v820
        %vm823 = vcmp.eq.f32.partialorder %v715, 0.0
        %v824 = vand.u32 %v715, 2147483648
        %v825 = vsel %vm823, %v824, %v822
        %v826 = vrsqrt.pop %v720
        %v827 = vmul.f32 %v720, %v826
        %vm828 = vcmp.eq.f32.partialorder %v720, inf
        %v829 = vsel %vm828, %v720, %v827
        %vm830 = vcmp.eq.f32.partialorder %v720, 0.0
        %v831 = vand.u32 %v720, 2147483648
        %v832 = vsel %vm830, %v831, %v829
        %v833 = vrsqrt.pop %v725
        %v834 = vmul.f32 %v725, %v833
        %vm835 = vcmp.eq.f32.partialorder %v725, inf
        %v836 = vsel %vm835, %v725, %v834
        %vm837 = vcmp.eq.f32.partialorder %v725, 0.0
        %v838 = vand.u32 %v725, 2147483648
        %v839 = vsel %vm837, %v838, %v836
        %v841 = vlaneseq
        %v842 = vshrl.u32 %v841, 7
        %v843 = vsub.s32 0, %v842
        %v844 = vrot.slane %v244, %v843
        %v847 = vsel %vm277, %v734, 0
        %v850 = vsel %vm277, %v741, 0
        %v853 = vsel %vm277, %v748, 0
        %v856 = vsel %vm277, %v755, 0
        %v859 = vsel %vm277, %v762, 0
        %v862 = vsel %vm277, %v769, 0
        %v865 = vsel %vm277, %v776, 0
        %v868 = vsel %vm277, %v783, 0
        %v871 = vsel %vm277, %v790, 0
        %v874 = vsel %vm277, %v797, 0
        %v877 = vsel %vm277, %v804, 0
        %v880 = vsel %vm277, %v811, 0
        %v883 = vsel %vm277, %v818, 0
        %v886 = vsel %vm277, %v825, 0
        %v889 = vsel %vm277, %v832, 0
        %v892 = vsel %vm277, %v839, 0
        %894 = vmatprep.subr.mxu0 0.0
        %895 = vmatpush1.msra.mxu0 %v246
        %896 = vmatprep.subr.mxu0 0.0
        %897 = vmatpush1.msra.mxu0 %v247
        %898 = vmatprep.subr.mxu0 0.0
        %899 = vmatpush1.msra.mxu0 %v248
        %900 = vmatprep.subr.mxu0 0.0
        %901 = vmatpush1.msra.mxu0 %v249
        %902 = vmatprep.subr.mxu0 0.0
        %903 = vmatpush1.msra.mxu0 0.0
        %904 = vmatprep.subr.mxu0 0.0
        %905 = vmatpush1.msra.mxu0 0.0
        %906 = vmatprep.subr.mxu0 0.0
        %907 = vmatpush1.msra.mxu0 0.0
        %908 = vmatprep.subr.mxu0 0.0
        %909 = vmatpush1.msra.mxu0 0.0
        %910 = vmatprep.subr.mxu0 0.0
        %911 = vmatpush1.msra.mxu0 0.0
        %912 = vmatprep.subr.mxu0 0.0
        %913 = vmatpush1.msra.mxu0 0.0
        %914 = vmatprep.subr.mxu0 0.0
        %915 = vmatpush1.msra.mxu0 0.0
        %916 = vmatprep.subr.mxu0 0.0
        %917 = vmatpush1.msra.mxu0 0.0
        %918 = vmatprep.subr.mxu0 0.0
        %919 = vmatpush1.msra.mxu0 0.0
        %920 = vmatprep.subr.mxu0 0.0
        %921 = vmatpush1.msra.mxu0 0.0
        %922 = vmatprep.subr.mxu0 0.0
        %923 = vmatpush1.msra.mxu0 0.0
        %924 = vmatprep.subr.mxu0 0.0
        %925 = vmatpush1.msra.mxu0 0.0
        %926 = vmatprep.subr.mxu0 0.0
        %927 = vmatpush1.msra.mxu0 0.0
        %928 = vmatprep.subr.mxu0 0.0
        %929 = vmatpush1.msra.mxu0 0.0
        %930 = vmatprep.subr.mxu0 0.0
        %931 = vmatpush1.msra.mxu0 0.0
        %932 = vmatprep.subr.mxu0 0.0
        %933 = vmatpush1.msra.mxu0 0.0
        %934 = vmatprep.subr.mxu0 0.0
        %935 = vmatpush1.msra.mxu0 0.0
        %936 = vmatprep.subr.mxu0 0.0
        %937 = vmatpush1.msra.mxu0 0.0
        %938 = vmatprep.subr.mxu0 0.0
        %939 = vmatpush1.msra.mxu0 0.0
        %940 = vmatprep.subr.mxu0 0.0
        %941 = vmatpush1.msra.mxu0 0.0
        %942 = vmatprep.subr.mxu0 0.0
        %943 = vmatpush1.msra.mxu0 0.0
        %944 = vmatprep.subr.mxu0 0.0
        %945 = vmatpush1.msra.mxu0 0.0
        %946 = vmatprep.subr.mxu0 0.0
        %947 = vmatpush1.msra.mxu0 0.0
        %948 = vmatprep.subr.mxu0 0.0
        %949 = vmatpush1.msra.mxu0 0.0
        %950 = vmatprep.subr.mxu0 0.0
        %951 = vmatpush1.msra.mxu0 0.0
        %952 = vmatprep.subr.mxu0 0.0
        %953 = vmatpush1.msra.mxu0 0.0
        %954 = vmatprep.subr.mxu0 0.0
        %955 = vmatpush1.msra.mxu0 0.0
        %956 = vmatprep.subr.mxu0 0.0
        %957 = vmatpush1.msra.mxu0 0.0
        %958 = vmatprep.mubr.f32.mxu0 0.0
        %959 = vmatmul.mubr.f32.gmra.mrb[0].mxu0 %v847
        %v960 = vpop.f32.mrb[0].mxu0
        %v961 = vadd.f32 %v844, %v960
        %v962 = vpop.f32.mrb[0].mxu0
        %963 = vmatprep.mubr.f32.mxu0 0.0
        %964 = vmatmul.mubr.f32.gmra.mrb[0].mxu0 %v850
        %v965 = vpop.f32.mrb[0].mxu0
        %v966 = vadd.f32 %v844, %v965
        %v967 = vpop.f32.mrb[0].mxu0
        %968 = vmatprep.mubr.f32.mxu0 0.0
        %969 = vmatmul.mubr.f32.gmra.mrb[0].mxu0 %v853
        %v970 = vpop.f32.mrb[0].mxu0
        %v971 = vadd.f32 %v844, %v970
        %v972 = vpop.f32.mrb[0].mxu0
        %973 = vmatprep.mubr.f32.mxu0 0.0
        %974 = vmatmul.mubr.f32.gmra.mrb[0].mxu0 %v856
        %v975 = vpop.f32.mrb[0].mxu0
        %v976 = vadd.f32 %v844, %v975
        %v977 = vpop.f32.mrb[0].mxu0
        %978 = vmatprep.mubr.f32.mxu0 0.0
        %979 = vmatmul.mubr.f32.gmra.mrb[0].mxu0 %v859
        %v980 = vpop.f32.mrb[0].mxu0
        %v981 = vadd.f32 %v844, %v980
        %v982 = vpop.f32.mrb[0].mxu0
        %983 = vmatprep.mubr.f32.mxu0 0.0
        %984 = vmatmul.mubr.f32.gmra.mrb[0].mxu0 %v862
        %v985 = vpop.f32.mrb[0].mxu0
        %v986 = vadd.f32 %v844, %v985
        %v987 = vpop.f32.mrb[0].mxu0
        %988 = vmatprep.mubr.f32.mxu0 0.0
        %989 = vmatmul.mubr.f32.gmra.mrb[0].mxu0 %v865
        %v990 = vpop.f32.mrb[0].mxu0
        %v991 = vadd.f32 %v844, %v990
        %v992 = vpop.f32.mrb[0].mxu0
        %993 = vmatprep.mubr.f32.mxu0 0.0
        %994 = vmatmul.mubr.f32.gmra.mrb[0].mxu0 %v868
        %v995 = vpop.f32.mrb[0].mxu0
        %v996 = vadd.f32 %v844, %v995
        %v997 = vpop.f32.mrb[0].mxu0
        %998 = vmatprep.mubr.f32.mxu0 0.0
        %999 = vmatmul.mubr.f32.gmra.mrb[0].mxu0 %v871
        %v1000 = vpop.f32.mrb[0].mxu0
        %v1001 = vadd.f32 %v844, %v1000
        %v1002 = vpop.f32.mrb[0].mxu0
        %1003 = vmatprep.mubr.f32.mxu0 0.0
        %1004 = vmatmul.mubr.f32.gmra.mrb[0].mxu0 %v874
        %v1005 = vpop.f32.mrb[0].mxu0
        %v1006 = vadd.f32 %v844, %v1005
        %v1007 = vpop.f32.mrb[0].mxu0
        %1008 = vmatprep.mubr.f32.mxu0 0.0
        %1009 = vmatmul.mubr.f32.gmra.mrb[0].mxu0 %v877
        %v1010 = vpop.f32.mrb[0].mxu0
        %v1011 = vadd.f32 %v844, %v1010
        %v1012 = vpop.f32.mrb[0].mxu0
        %1013 = vmatprep.mubr.f32.mxu0 0.0
        %1014 = vmatmul.mubr.f32.gmra.mrb[0].mxu0 %v880
        %v1015 = vpop.f32.mrb[0].mxu0
        %v1016 = vadd.f32 %v844, %v1015
        %v1017 = vpop.f32.mrb[0].mxu0
        %1018 = vmatprep.mubr.f32.mxu0 0.0
        %1019 = vmatmul.mubr.f32.gmra.mrb[0].mxu0 %v883
        %v1020 = vpop.f32.mrb[0].mxu0
        %v1021 = vadd.f32 %v844, %v1020
        %v1022 = vpop.f32.mrb[0].mxu0
        %1023 = vmatprep.mubr.f32.mxu0 0.0
        %1024 = vmatmul.mubr.f32.gmra.mrb[0].mxu0 %v886
        %v1025 = vpop.f32.mrb[0].mxu0
        %v1026 = vadd.f32 %v844, %v1025
        %v1027 = vpop.f32.mrb[0].mxu0
        %1028 = vmatprep.mubr.f32.mxu0 0.0
        %1029 = vmatmul.mubr.f32.gmra.mrb[0].mxu0 %v889
        %v1030 = vpop.f32.mrb[0].mxu0
        %v1031 = vadd.f32 %v844, %v1030
        %v1032 = vpop.f32.mrb[0].mxu0
        %1033 = vmatprep.mubr.f32.mxu0 0.0
        %1034 = vmatmul.mubr.f32.gmra.mrb[0].mxu0 %v892
        %v1035 = vpop.f32.mrb[0].mxu0
        %v1036 = vadd.f32 %v844, %v1035
        %v1037 = vpop.f32.mrb[0].mxu0
        %1038 = vdwg.mxu0
        %v1039 = vmax.f32 %v961, 0.0
        %v1040 = vmax.f32 %v966, 0.0
        %v1041 = vmax.f32 %v971, 0.0
        %v1042 = vmax.f32 %v976, 0.0
        %v1043 = vmax.f32 %v981, 0.0
        %v1044 = vmax.f32 %v986, 0.0
        %v1045 = vmax.f32 %v991, 0.0
        %v1046 = vmax.f32 %v996, 0.0
        %v1047 = vmax.f32 %v1001, 0.0
        %v1048 = vmax.f32 %v1006, 0.0
        %v1049 = vmax.f32 %v1011, 0.0
        %v1050 = vmax.f32 %v1016, 0.0
        %v1051 = vmax.f32 %v1021, 0.0
        %v1052 = vmax.f32 %v1026, 0.0
        %v1053 = vmax.f32 %v1031, 0.0
        %v1054 = vmax.f32 %v1036, 0.0
        %v1056 = vlaneseq
        %v1057 = vshrl.u32 %v1056, 7
        %v1058 = vsub.s32 0, %v1057
        %v1059 = vrot.slane %v245, %v1058
        %v1062 = vsel %vm277, %v1039, 0
        %v1065 = vsel %vm277, %v1040, 0
        %v1068 = vsel %vm277, %v1041, 0
        %v1071 = vsel %vm277, %v1042, 0
        %v1074 = vsel %vm277, %v1043, 0
        %v1077 = vsel %vm277, %v1044, 0
        %v1080 = vsel %vm277, %v1045, 0
        %v1083 = vsel %vm277, %v1046, 0
        %v1086 = vsel %vm277, %v1047, 0
        %v1089 = vsel %vm277, %v1048, 0
        %v1092 = vsel %vm277, %v1049, 0
        %v1095 = vsel %vm277, %v1050, 0
        %v1098 = vsel %vm277, %v1051, 0
        %v1101 = vsel %vm277, %v1052, 0
        %v1104 = vsel %vm277, %v1053, 0
        %v1107 = vsel %vm277, %v1054, 0
        %1109 = vmatprep.subr.mxu0 0.0
        %1110 = vmatpush1.msra.mxu0 %v250
        %1111 = vmatprep.subr.mxu0 0.0
        %1112 = vmatpush1.msra.mxu0 %v251
        %1113 = vmatprep.subr.mxu0 0.0
        %1114 = vmatpush1.msra.mxu0 %v252
        %1115 = vmatprep.subr.mxu0 0.0
        %1116 = vmatpush1.msra.mxu0 %v253
        %1117 = vmatprep.subr.mxu0 0.0
        %1118 = vmatpush1.msra.mxu0 0.0
        %1119 = vmatprep.subr.mxu0 0.0
        %1120 = vmatpush1.msra.mxu0 0.0
        %1121 = vmatprep.subr.mxu0 0.0
        %1122 = vmatpush1.msra.mxu0 0.0
        %1123 = vmatprep.subr.mxu0 0.0
        %1124 = vmatpush1.msra.mxu0 0.0
        %1125 = vmatprep.subr.mxu0 0.0
        %1126 = vmatpush1.msra.mxu0 0.0
        %1127 = vmatprep.subr.mxu0 0.0
        %1128 = vmatpush1.msra.mxu0 0.0
        %1129 = vmatprep.subr.mxu0 0.0
        %1130 = vmatpush1.msra.mxu0 0.0
        %1131 = vmatprep.subr.mxu0 0.0
        %1132 = vmatpush1.msra.mxu0 0.0
        %1133 = vmatprep.subr.mxu0 0.0
        %1134 = vmatpush1.msra.mxu0 0.0
        %1135 = vmatprep.subr.mxu0 0.0
        %1136 = vmatpush1.msra.mxu0 0.0
        %1137 = vmatprep.subr.mxu0 0.0
        %1138 = vmatpush1.msra.mxu0 0.0
        %1139 = vmatprep.subr.mxu0 0.0
        %1140 = vmatpush1.msra.mxu0 0.0
        %1141 = vmatprep.subr.mxu0 0.0
        %1142 = vmatpush1.msra.mxu0 0.0
        %1143 = vmatprep.subr.mxu0 0.0
        %1144 = vmatpush1.msra.mxu0 0.0
        %1145 = vmatprep.subr.mxu0 0.0
        %1146 = vmatpush1.msra.mxu0 0.0
        %1147 = vmatprep.subr.mxu0 0.0
        %1148 = vmatpush1.msra.mxu0 0.0
        %1149 = vmatprep.subr.mxu0 0.0
        %1150 = vmatpush1.msra.mxu0 0.0
        %1151 = vmatprep.subr.mxu0 0.0
        %1152 = vmatpush1.msra.mxu0 0.0
        %1153 = vmatprep.subr.mxu0 0.0
        %1154 = vmatpush1.msra.mxu0 0.0
        %1155 = vmatprep.subr.mxu0 0.0
        %1156 = vmatpush1.msra.mxu0 0.0
        %1157 = vmatprep.subr.mxu0 0.0
        %1158 = vmatpush1.msra.mxu0 0.0
        %1159 = vmatprep.subr.mxu0 0.0
        %1160 = vmatpush1.msra.mxu0 0.0
        %1161 = vmatprep.subr.mxu0 0.0
        %1162 = vmatpush1.msra.mxu0 0.0
        %1163 = vmatprep.subr.mxu0 0.0
        %1164 = vmatpush1.msra.mxu0 0.0
        %1165 = vmatprep.subr.mxu0 0.0
        %1166 = vmatpush1.msra.mxu0 0.0
        %1167 = vmatprep.subr.mxu0 0.0
        %1168 = vmatpush1.msra.mxu0 0.0
        %1169 = vmatprep.subr.mxu0 0.0
        %1170 = vmatpush1.msra.mxu0 0.0
        %1171 = vmatprep.subr.mxu0 0.0
        %1172 = vmatpush1.msra.mxu0 0.0
        %1173 = vmatprep.mubr.f32.mxu0 0.0
        %1174 = vmatmul.mubr.f32.gmra.mrb[0].mxu0 %v1062
        %v1175 = vpop.f32.mrb[0].mxu0
        %v1176 = vadd.f32 %v1059, %v1175
        %v1177 = vpop.f32.mrb[0].mxu0
        %1178 = vmatprep.mubr.f32.mxu0 0.0
        %1179 = vmatmul.mubr.f32.gmra.mrb[0].mxu0 %v1065
        %v1180 = vpop.f32.mrb[0].mxu0
        %v1181 = vadd.f32 %v1059, %v1180
        %v1182 = vpop.f32.mrb[0].mxu0
        %1183 = vmatprep.mubr.f32.mxu0 0.0
        %1184 = vmatmul.mubr.f32.gmra.mrb[0].mxu0 %v1068
        %v1185 = vpop.f32.mrb[0].mxu0
        %v1186 = vadd.f32 %v1059, %v1185
        %v1187 = vpop.f32.mrb[0].mxu0
        %1188 = vmatprep.mubr.f32.mxu0 0.0
        %1189 = vmatmul.mubr.f32.gmra.mrb[0].mxu0 %v1071
        %v1190 = vpop.f32.mrb[0].mxu0
        %v1191 = vadd.f32 %v1059, %v1190
        %v1192 = vpop.f32.mrb[0].mxu0
        %1193 = vmatprep.mubr.f32.mxu0 0.0
        %1194 = vmatmul.mubr.f32.gmra.mrb[0].mxu0 %v1074
        %v1195 = vpop.f32.mrb[0].mxu0
        %v1196 = vadd.f32 %v1059, %v1195
        %v1197 = vpop.f32.mrb[0].mxu0
        %1198 = vmatprep.mubr.f32.mxu0 0.0
        %1199 = vmatmul.mubr.f32.gmra.mrb[0].mxu0 %v1077
        %v1200 = vpop.f32.mrb[0].mxu0
        %v1201 = vadd.f32 %v1059, %v1200
        %v1202 = vpop.f32.mrb[0].mxu0
        %1203 = vmatprep.mubr.f32.mxu0 0.0
        %1204 = vmatmul.mubr.f32.gmra.mrb[0].mxu0 %v1080
        %v1205 = vpop.f32.mrb[0].mxu0
        %v1206 = vadd.f32 %v1059, %v1205
        %v1207 = vpop.f32.mrb[0].mxu0
        %1208 = vmatprep.mubr.f32.mxu0 0.0
        %1209 = vmatmul.mubr.f32.gmra.mrb[0].mxu0 %v1083
        %v1210 = vpop.f32.mrb[0].mxu0
        %v1211 = vadd.f32 %v1059, %v1210
        %v1212 = vpop.f32.mrb[0].mxu0
        %1213 = vmatprep.mubr.f32.mxu0 0.0
        %1214 = vmatmul.mubr.f32.gmra.mrb[0].mxu0 %v1086
        %v1215 = vpop.f32.mrb[0].mxu0
        %v1216 = vadd.f32 %v1059, %v1215
        %v1217 = vpop.f32.mrb[0].mxu0
        %1218 = vmatprep.mubr.f32.mxu0 0.0
        %1219 = vmatmul.mubr.f32.gmra.mrb[0].mxu0 %v1089
        %v1220 = vpop.f32.mrb[0].mxu0
        %v1221 = vadd.f32 %v1059, %v1220
        %v1222 = vpop.f32.mrb[0].mxu0
        %1223 = vmatprep.mubr.f32.mxu0 0.0
        %1224 = vmatmul.mubr.f32.gmra.mrb[0].mxu0 %v1092
        %v1225 = vpop.f32.mrb[0].mxu0
        %v1226 = vadd.f32 %v1059, %v1225
        %v1227 = vpop.f32.mrb[0].mxu0
        %1228 = vmatprep.mubr.f32.mxu0 0.0
        %1229 = vmatmul.mubr.f32.gmra.mrb[0].mxu0 %v1095
        %v1230 = vpop.f32.mrb[0].mxu0
        %v1231 = vadd.f32 %v1059, %v1230
        %v1232 = vpop.f32.mrb[0].mxu0
        %1233 = vmatprep.mubr.f32.mxu0 0.0
        %1234 = vmatmul.mubr.f32.gmra.mrb[0].mxu0 %v1098
        %v1235 = vpop.f32.mrb[0].mxu0
        %v1236 = vadd.f32 %v1059, %v1235
        %v1237 = vpop.f32.mrb[0].mxu0
        %1238 = vmatprep.mubr.f32.mxu0 0.0
        %1239 = vmatmul.mubr.f32.gmra.mrb[0].mxu0 %v1101
        %v1240 = vpop.f32.mrb[0].mxu0
        %v1241 = vadd.f32 %v1059, %v1240
        %v1242 = vpop.f32.mrb[0].mxu0
        %1243 = vmatprep.mubr.f32.mxu0 0.0
        %1244 = vmatmul.mubr.f32.gmra.mrb[0].mxu0 %v1104
        %v1245 = vpop.f32.mrb[0].mxu0
        %v1246 = vadd.f32 %v1059, %v1245
        %v1247 = vpop.f32.mrb[0].mxu0
        %1248 = vmatprep.mubr.f32.mxu0 0.0
        %1249 = vmatmul.mubr.f32.gmra.mrb[0].mxu0 %v1107
        %v1250 = vpop.f32.mrb[0].mxu0
        %v1251 = vadd.f32 %v1059, %v1250
        %v1252 = vpop.f32.mrb[0].mxu0
        %1253 = vdwg.mxu0
        %v1254 = vmax.f32 %v1176, 0.0
        %v1255 = vmax.f32 %v1181, 0.0
        %v1256 = vmax.f32 %v1186, 0.0
        %v1257 = vmax.f32 %v1191, 0.0
        %v1258 = vmax.f32 %v1196, 0.0
        %v1259 = vmax.f32 %v1201, 0.0
        %v1260 = vmax.f32 %v1206, 0.0
        %v1261 = vmax.f32 %v1211, 0.0
        %v1262 = vmax.f32 %v1216, 0.0
        %v1263 = vmax.f32 %v1221, 0.0
        %v1264 = vmax.f32 %v1226, 0.0
        %v1265 = vmax.f32 %v1231, 0.0
        %v1266 = vmax.f32 %v1236, 0.0
        %v1267 = vmax.f32 %v1241, 0.0
        %v1268 = vmax.f32 %v1246, 0.0
        %v1269 = vmax.f32 %v1251, 0.0
        %v1271 = vlaneseq
        %v1272 = vshrl.u32 %v1271, 7
        %v1273 = vsub.s32 0, %v1272
        %v1274 = vrot.slane %v243, %v1273
        %v1277 = vsel %vm277, %v1254, 0
        %v1280 = vsel %vm277, %v1255, 0
        %v1283 = vsel %vm277, %v1256, 0
        %v1286 = vsel %vm277, %v1257, 0
        %v1289 = vsel %vm277, %v1258, 0
        %v1292 = vsel %vm277, %v1259, 0
        %v1295 = vsel %vm277, %v1260, 0
        %v1298 = vsel %vm277, %v1261, 0
        %v1301 = vsel %vm277, %v1262, 0
        %v1304 = vsel %vm277, %v1263, 0
        %v1307 = vsel %vm277, %v1264, 0
        %v1310 = vsel %vm277, %v1265, 0
        %v1313 = vsel %vm277, %v1266, 0
        %v1316 = vsel %vm277, %v1267, 0
        %v1319 = vsel %vm277, %v1268, 0
        %v1322 = vsel %vm277, %v1269, 0
        %1324 = vmatprep.subr.mxu0 0.0
        %1325 = vmatpush1.msra.mxu0 %v254
        %1326 = vmatprep.subr.mxu0 0.0
        %1327 = vmatpush1.msra.mxu0 %v255
        %1328 = vmatprep.subr.mxu0 0.0
        %1329 = vmatpush1.msra.mxu0 %v256
        %1330 = vmatprep.subr.mxu0 0.0
        %1331 = vmatpush1.msra.mxu0 %v257
        %1332 = vmatprep.subr.mxu0 0.0
        %1333 = vmatpush1.msra.mxu0 0.0
        %1334 = vmatprep.subr.mxu0 0.0
        %1335 = vmatpush1.msra.mxu0 0.0
        %1336 = vmatprep.subr.mxu0 0.0
        %1337 = vmatpush1.msra.mxu0 0.0
        %1338 = vmatprep.subr.mxu0 0.0
        %1339 = vmatpush1.msra.mxu0 0.0
        %1340 = vmatprep.subr.mxu0 0.0
        %1341 = vmatpush1.msra.mxu0 0.0
        %1342 = vmatprep.subr.mxu0 0.0
        %1343 = vmatpush1.msra.mxu0 0.0
        %1344 = vmatprep.subr.mxu0 0.0
        %1345 = vmatpush1.msra.mxu0 0.0
        %1346 = vmatprep.subr.mxu0 0.0
        %1347 = vmatpush1.msra.mxu0 0.0
        %1348 = vmatprep.subr.mxu0 0.0
        %1349 = vmatpush1.msra.mxu0 0.0
        %1350 = vmatprep.subr.mxu0 0.0
        %1351 = vmatpush1.msra.mxu0 0.0
        %1352 = vmatprep.subr.mxu0 0.0
        %1353 = vmatpush1.msra.mxu0 0.0
        %1354 = vmatprep.subr.mxu0 0.0
        %1355 = vmatpush1.msra.mxu0 0.0
        %1356 = vmatprep.subr.mxu0 0.0
        %1357 = vmatpush1.msra.mxu0 0.0
        %1358 = vmatprep.subr.mxu0 0.0
        %1359 = vmatpush1.msra.mxu0 0.0
        %1360 = vmatprep.subr.mxu0 0.0
        %1361 = vmatpush1.msra.mxu0 0.0
        %1362 = vmatprep.subr.mxu0 0.0
        %1363 = vmatpush1.msra.mxu0 0.0
        %1364 = vmatprep.subr.mxu0 0.0
        %1365 = vmatpush1.msra.mxu0 0.0
        %1366 = vmatprep.subr.mxu0 0.0
        %1367 = vmatpush1.msra.mxu0 0.0
        %1368 = vmatprep.subr.mxu0 0.0
        %1369 = vmatpush1.msra.mxu0 0.0
        %1370 = vmatprep.subr.mxu0 0.0
        %1371 = vmatpush1.msra.mxu0 0.0
        %1372 = vmatprep.subr.mxu0 0.0
        %1373 = vmatpush1.msra.mxu0 0.0
        %1374 = vmatprep.subr.mxu0 0.0
        %1375 = vmatpush1.msra.mxu0 0.0
        %1376 = vmatprep.subr.mxu0 0.0
        %1377 = vmatpush1.msra.mxu0 0.0
        %1378 = vmatprep.subr.mxu0 0.0
        %1379 = vmatpush1.msra.mxu0 0.0
        %1380 = vmatprep.subr.mxu0 0.0
        %1381 = vmatpush1.msra.mxu0 0.0
        %1382 = vmatprep.subr.mxu0 0.0
        %1383 = vmatpush1.msra.mxu0 0.0
        %1384 = vmatprep.subr.mxu0 0.0
        %1385 = vmatpush1.msra.mxu0 0.0
        %1386 = vmatprep.subr.mxu0 0.0
        %1387 = vmatpush1.msra.mxu0 0.0
        %1388 = vmatprep.mubr.f32.mxu0 0.0
        %1389 = vmatmul.mubr.f32.gmra.mrb[0].mxu0 %v1277
        %v1390 = vpop.f32.mrb[0].mxu0
        %v1391 = vadd.f32 %v1274, %v1390
        %v1392 = vpop.f32.mrb[0].mxu0
        %1393 = vmatprep.mubr.f32.mxu0 0.0
        %1394 = vmatmul.mubr.f32.gmra.mrb[0].mxu0 %v1280
        %v1395 = vpop.f32.mrb[0].mxu0
        %v1396 = vadd.f32 %v1274, %v1395
        %v1397 = vpop.f32.mrb[0].mxu0
        %1398 = vmatprep.mubr.f32.mxu0 0.0
        %1399 = vmatmul.mubr.f32.gmra.mrb[0].mxu0 %v1283
        %v1400 = vpop.f32.mrb[0].mxu0
        %v1401 = vadd.f32 %v1274, %v1400
        %v1402 = vpop.f32.mrb[0].mxu0
        %1403 = vmatprep.mubr.f32.mxu0 0.0
        %1404 = vmatmul.mubr.f32.gmra.mrb[0].mxu0 %v1286
        %v1405 = vpop.f32.mrb[0].mxu0
        %v1406 = vadd.f32 %v1274, %v1405
        %v1407 = vpop.f32.mrb[0].mxu0
        %1408 = vmatprep.mubr.f32.mxu0 0.0
        %1409 = vmatmul.mubr.f32.gmra.mrb[0].mxu0 %v1289
        %v1410 = vpop.f32.mrb[0].mxu0
        %v1411 = vadd.f32 %v1274, %v1410
        %v1412 = vpop.f32.mrb[0].mxu0
        %1413 = vmatprep.mubr.f32.mxu0 0.0
        %1414 = vmatmul.mubr.f32.gmra.mrb[0].mxu0 %v1292
        %v1415 = vpop.f32.mrb[0].mxu0
        %v1416 = vadd.f32 %v1274, %v1415
        %v1417 = vpop.f32.mrb[0].mxu0
        %1418 = vmatprep.mubr.f32.mxu0 0.0
        %1419 = vmatmul.mubr.f32.gmra.mrb[0].mxu0 %v1295
        %v1420 = vpop.f32.mrb[0].mxu0
        %v1421 = vadd.f32 %v1274, %v1420
        %v1422 = vpop.f32.mrb[0].mxu0
        %1423 = vmatprep.mubr.f32.mxu0 0.0
        %1424 = vmatmul.mubr.f32.gmra.mrb[0].mxu0 %v1298
        %v1425 = vpop.f32.mrb[0].mxu0
        %v1426 = vadd.f32 %v1274, %v1425
        %v1427 = vpop.f32.mrb[0].mxu0
        %1428 = vmatprep.mubr.f32.mxu0 0.0
        %1429 = vmatmul.mubr.f32.gmra.mrb[0].mxu0 %v1301
        %v1430 = vpop.f32.mrb[0].mxu0
        %v1431 = vadd.f32 %v1274, %v1430
        %v1432 = vpop.f32.mrb[0].mxu0
        %1433 = vmatprep.mubr.f32.mxu0 0.0
        %1434 = vmatmul.mubr.f32.gmra.mrb[0].mxu0 %v1304
        %v1435 = vpop.f32.mrb[0].mxu0
        %v1436 = vadd.f32 %v1274, %v1435
        %v1437 = vpop.f32.mrb[0].mxu0
        %1438 = vmatprep.mubr.f32.mxu0 0.0
        %1439 = vmatmul.mubr.f32.gmra.mrb[0].mxu0 %v1307
        %v1440 = vpop.f32.mrb[0].mxu0
        %v1441 = vadd.f32 %v1274, %v1440
        %v1442 = vpop.f32.mrb[0].mxu0
        %1443 = vmatprep.mubr.f32.mxu0 0.0
        %1444 = vmatmul.mubr.f32.gmra.mrb[0].mxu0 %v1310
        %v1445 = vpop.f32.mrb[0].mxu0
        %v1446 = vadd.f32 %v1274, %v1445
        %v1447 = vpop.f32.mrb[0].mxu0
        %1448 = vmatprep.mubr.f32.mxu0 0.0
        %1449 = vmatmul.mubr.f32.gmra.mrb[0].mxu0 %v1313
        %v1450 = vpop.f32.mrb[0].mxu0
        %v1451 = vadd.f32 %v1274, %v1450
        %v1452 = vpop.f32.mrb[0].mxu0
        %1453 = vmatprep.mubr.f32.mxu0 0.0
        %1454 = vmatmul.mubr.f32.gmra.mrb[0].mxu0 %v1316
        %v1455 = vpop.f32.mrb[0].mxu0
        %v1456 = vadd.f32 %v1274, %v1455
        %v1457 = vpop.f32.mrb[0].mxu0
        %1458 = vmatprep.mubr.f32.mxu0 0.0
        %1459 = vmatmul.mubr.f32.gmra.mrb[0].mxu0 %v1319
        %v1460 = vpop.f32.mrb[0].mxu0
        %v1461 = vadd.f32 %v1274, %v1460
        %v1462 = vpop.f32.mrb[0].mxu0
        %1463 = vmatprep.mubr.f32.mxu0 0.0
        %1464 = vmatmul.mubr.f32.gmra.mrb[0].mxu0 %v1322
        %v1465 = vpop.f32.mrb[0].mxu0
        %v1466 = vadd.f32 %v1274, %v1465
        %v1467 = vpop.f32.mrb[0].mxu0
        %1468 = vdwg.mxu0
        %1469 = vst [vmem:[%s218] sm:$0xff] %v1391
        %1470 = vst [vmem:[%s218 + $0x8] sm:$0xff] %v1396
        %1471 = vst [vmem:[%s218 + $0x10] sm:$0xff] %v1401
        %1472 = vst [vmem:[%s218 + $0x18] sm:$0xff] %v1406
        %1473 = vst [vmem:[%s218 + $0x20] sm:$0xff] %v1411
        %1474 = vst [vmem:[%s218 + $0x28] sm:$0xff] %v1416
        %1475 = vst [vmem:[%s218 + $0x30] sm:$0xff] %v1421
        %1476 = vst [vmem:[%s218 + $0x38] sm:$0xff] %v1426
        %1477 = vst [vmem:[%s218 + $0x40] sm:$0xff] %v1431
        %1478 = vst [vmem:[%s218 + $0x48] sm:$0xff] %v1436
        %1479 = vst [vmem:[%s218 + $0x50] sm:$0xff] %v1441
        %1480 = vst [vmem:[%s218 + $0x58] sm:$0xff] %v1446
        %1481 = vst [vmem:[%s218 + $0x60] sm:$0xff] %v1451
        %1482 = vst [vmem:[%s218 + $0x68] sm:$0xff] %v1456
        %1483 = vst [vmem:[%s218 + $0x70] sm:$0xff] %v1461
        %1484 = vst [vmem:[%s218 + $0x78] sm:$0xff] %v1466
        %s1485 = sand.u32 %s137, 1
        %s1486 = scalar_lea.sflag [#allocation3], %s1485
        %s1487 = sand.u32 %s137, 1
        %s1488 = smul.addr %s1487, 128
        %s1489 = scalar_lea.vmem [#allocation2], %s1488
        // Predicated region
        $region41: #{tpu_custom_call.1} parent=39 // pred_check
          %p1490 = pneg %p147
        $region42: #{tpu_custom_call.1} parent=39 // pred_check_branch
          %1492 = sbr.rel (%p1490) target = $region44
        $region43: #{tpu_custom_call.1} parent=39 // pred_region
          %s1493 = smul.u32 16, %s19
          %s1495 = ssub.s32 2048, 2048
          %1496 = vsyncadd %s1486, %s1495
          %s1497 = smul.addr %s1493, 128
          %s1498 = scalar_lea.hbm %s5, %s1497
          %s1499 = sshll.u32 %s1489, 4
          %s1500 = int_to_ptr.vmem [resolvable:$true] %s1499
          %1505 = dma.vmem_to_hbm [thread:$0]  %s1500, 2048, %s1498, %s1486, 128, 128, 8
        $region44: #{tpu_custom_call.1} parent=39 // pred_fallthru
          _
      $region40: #{tpu_custom_call.1} parent=5 // pred_fallthru
        _
      %p1506 = scmp.le.s32.totalorder 2, %s14
      // Predicated region
      $region45: #{tpu_custom_call.1} parent=5 // pred_check
        %p1507 = pneg %p1506
      $region46: #{tpu_custom_call.1} parent=5 // pred_check_branch
        %1509 = sbr.rel (%p1507) target = $region48
      $region47: #{tpu_custom_call.1} parent=5 // pred_region
        %s1510 = ssub.s32 %s14, 2
        // Predicated region
        $region49: #{tpu_custom_call.1} parent=47 // pred_check
          %p1511 = pneg %p153
        $region50: #{tpu_custom_call.1} parent=47 // pred_check_branch
          %1513 = sbr.rel (%p1511) target = $region52
        $region51: #{tpu_custom_call.1} parent=47 // pred_region
          %s1514 = sand.u32 %s138, 1
          %s1515 = scalar_lea.sflag [#allocation3], %s1514
          %s1516 = sand.u32 %s138, 1
          %s1517 = smul.addr %s1516, 128
          %s1518 = scalar_lea.vmem [#allocation2], %s1517
          %1519 = dma.done %s1515, 2048
        $region52: #{tpu_custom_call.1} parent=47 // pred_fallthru
          _
      $region48: #{tpu_custom_call.1} parent=5 // pred_fallthru
        _
    $region6: #{tpu_custom_call.1} parent=1 // loop_footer
      %s18 = sadd.s32 1, %s14
    $region7: #{tpu_custom_call.1} parent=1 // loop_footer_branch
      %13 = sbr.rel target = $region3
    $region8: #{tpu_custom_call.1} parent=1 // loop_exit
      _
    %1520 = vsyncpa [#allocation3], 1
    %s1521 = scalar_lea.sflag [#allocation3], 1
    %1522 = vsyncpa %s1521, 1

</llo_original>
